<compile_context>
chip_gen: v7x
topology: tpu7x:2x2x1
jax: 0.10.0
libtpu: 0.0.40
codegen_flags: <defaults>
</compile_context>

<pallas_src>
import jax
import jax.numpy as jnp
from jax.experimental import pallas as pl
from jax.experimental.pallas import tpu as pltpu

# ---- model config (mirrors model_config dict) -------------------------------
HIDDEN = 32          # HIDDEN_DIM_LSTM
NUM_LAYERS = 2       # NUM_LAYERS (kernel hard-codes 2 stacked layers)
B = 2                # batch
T = 8                # sequence length


def lstm_ae_kernel(x_ref,      # (T*B, 1)    time-major, flattened: row t*B + i
                   w_ref,      # (6H+24, 8H) packed weight slab (see pack_params)
                   out_ref):   # (B, 2H)     [ last_hidden | recon ] lane-packed
    Bn = out_ref.shape[0]
    H = out_ref.shape[1] // 2
    Tn = x_ref.shape[0] // Bn

    # slab row offsets (all multiples of 8 -> aligned sublane slices)
    R_WIH0 = 2 * H
    R_B01 = 2 * H + 8
    R_MLPW = 2 * H + 16
    R_MLPB = 6 * H + 16

    # ---- unpack the single weight slab -------------------------------------
    G = w_ref[0:2 * H, :]                    # (2H, 8H) fused recurrent RHS [[whh0,wih1],[0,whh1]]
    wih0j = w_ref[R_WIH0:R_WIH0 + 1, :]      # (1, 8H)  layer-0 input weights (layer-1 lanes = 0)
    b01j = w_ref[R_B01:R_B01 + 1, :]         # (1, 8H)  [b0 | b1] in joint lane order

    # ---- hoisted input path: additive gate term for every step, both layers ---
    # layer-0 lanes get x[t]*wih0 + b0, layer-1 lanes get b1 (wih0_joint is zero there).
    add_all = x_ref[...] * wih0j + b01j      # (T*B, 8H)

    def joint_cell(gates, c):
        # joint lane order [i0 i1 f0 f1 o0 o1 g0 g1]:
        # one sigmoid + one tanh cover BOTH layers' gates.
        sig = jax.nn.sigmoid(gates[:, 0:6 * H])
        g = jnp.tanh(gates[:, 6 * H:8 * H])
        i = sig[:, 0:2 * H]
        f = sig[:, 2 * H:4 * H]
        o = sig[:, 4 * H:6 * H]
        c_new = f * c + i * g
        h_new = o * jnp.tanh(c_new)
        return h_new, c_new

    lane = jax.lax.broadcasted_iota(jnp.int32, (Bn, 2 * H), 1)
    zeros2 = jnp.zeros((Bn, 2 * H), jnp.float32)

    # ---- wavefront step 0: layer-0 time step 0 only (h0[-1]=c0[-1]=0 -> no matmul).
    #      Mask keeps the layer-1 half at zero (h1[-1]=c1[-1]=0).
    h, c = joint_cell(add_all[0:Bn, :], zeros2)
    h = jnp.where(lane < H, h, 0.0)
    c = jnp.where(lane < H, c, 0.0)

    # ---- wavefront steps 1..T-1: layer-0 step s + layer-1 step s-1, ONE fused dot.
    #      h = [h0[s-1] | h1[s-2]], c = [c0[s-1] | c1[s-2]] going in; the joint cell
    #      output is directly the LHS of the next fused matmul. Fully unrolled (static T).
    for s in range(1, Tn):
        fused = jnp.dot(h, G, preferred_element_type=jnp.float32)      # (B, 8H)
        h, c = joint_cell(fused + add_all[s * Bn:(s + 1) * Bn, :], c)

    # ---- wavefront step T: layer-1 step T-1 only (layer-0 half of the result unused).
    fused = jnp.dot(h, G, preferred_element_type=jnp.float32)
    h, _ = joint_cell(fused + b01j, c)
    last_hidden = h[:, H:2 * H]              # hidden[-1] = h1[T-1]

    # ---- MLP autoencoder: weights zero-padded to (H,H); zero padding + ReLU(0)=0 and
    #      zero-padded wd2 rows keep the result exact. -------------------------------
    we1 = w_ref[R_MLPW + 0 * H:R_MLPW + 1 * H, 0:H]
    we2 = w_ref[R_MLPW + 1 * H:R_MLPW + 2 * H, 0:H]
    wd1 = w_ref[R_MLPW + 2 * H:R_MLPW + 3 * H, 0:H]
    wd2 = w_ref[R_MLPW + 3 * H:R_MLPW + 4 * H, 0:H]
    brow = w_ref[R_MLPB:R_MLPB + 1, :]
    be1 = brow[:, 0:H]
    be2 = brow[:, H:2 * H]
    bd1 = brow[:, 2 * H:3 * H]
    bd2 = brow[:, 3 * H:4 * H]

    z = jnp.maximum(jnp.dot(last_hidden, we1, preferred_element_type=jnp.float32) + be1, 0.0)
    z = jnp.maximum(jnp.dot(z, we2, preferred_element_type=jnp.float32) + be2, 0.0)
    r = jnp.maximum(jnp.dot(z, wd1, preferred_element_type=jnp.float32) + bd1, 0.0)
    r = jnp.dot(r, wd2, preferred_element_type=jnp.float32) + bd2

    # single lane-packed output store: [ last_hidden | recon ]
    out_ref[...] = jnp.concatenate([last_hidden, r], axis=1)


# ---------------------------- packing (done ONCE, off the per-call path) -------
def pack_params(params):
    """Pack all weights into ONE (6H+24, 8H) f32 slab (single weight DMA).

    Joint gate/lane order along the 8H axis is [i0 i1 f0 f1 o0 o1 g0 g1]
    (PyTorch stores gates as [i f g o]); suffixes 0/1 are LSTM layers 0/1.
    NOTE: b0/b1 must already be bias_ih + bias_hh summed (PyTorch keeps them
    separate) -- init_params below does this; sum them here when loading a
    real PyTorch state dict.
    """
    H = HIDDEN
    W = 8 * H

    def gate_cols(w):
        return w[..., 0:H], w[..., H:2 * H], w[..., 2 * H:3 * H], w[..., 3 * H:4 * H]

    def joint(w_l0, w_l1):
        i0, f0, g0, o0 = gate_cols(w_l0)
        i1, f1, g1, o1 = gate_cols(w_l1)
        return jnp.concatenate([i0, i1, f0, f1, o0, o1, g0, g1], axis=-1)

    zH = jnp.zeros((H, 4 * H), jnp.float32)
    z1 = jnp.zeros((1, 4 * H), jnp.float32)

    # Fused recurrent RHS: [h0 | h1] @ G = [h0@whh0 | h0@wih1 + h1@whh1]
    G = jnp.concatenate([joint(params["whh0"], params["wih1"]),
                         joint(zH, params["whh1"])], axis=0)           # (2H, 8H)
    wih0j = joint(params["wih0"], z1)                                  # (1, 8H)
    b01j = joint(params["b0"], params["b1"])                           # (1, 8H)

    def padw(w):   # zero-pad an MLP weight to (H, H); exact because ReLU(0)=0
        return jnp.pad(w, ((0, H - w.shape[0]), (0, H - w.shape[1])))

    def padb(b):   # zero-pad an MLP bias to (1, H)
        return jnp.pad(b, ((0, 0), (0, H - b.shape[1])))

    def lanes(blk):  # pad lane dim to 8H
        return jnp.pad(blk, ((0, 0), (0, W - blk.shape[1])))

    pad7 = jnp.zeros((7, W), jnp.float32)
    bias_row = jnp.concatenate([padb(params["be1"]), padb(params["be2"]),
                                padb(params["bd1"]), padb(params["bd2"])], axis=1)  # (1, 4H)

    slab = jnp.concatenate([
        G,                               # rows 0      : 2H
        wih0j, pad7,                     # row  2H        (8-aligned)
        b01j, pad7,                      # row  2H+8      (8-aligned)
        lanes(padw(params["we1"])),      # rows 2H+16 : 3H+16
        lanes(padw(params["we2"])),      # rows 3H+16 : 4H+16
        lanes(padw(params["wd1"])),      # rows 4H+16 : 5H+16
        lanes(padw(params["wd2"])),      # rows 5H+16 : 6H+16
        lanes(bias_row),                 # row  6H+16     (8-aligned)
        pad7,                            # pad rows to a multiple of 8
    ], axis=0).astype(jnp.float32)       # (6H+24, 8H) = (216, 256)
    return slab


# ---------------------------- per-call wrapper ---------------------------------
def model_handler_forward(x, slab):
    """x: (B, T, 1) float32 (batch-first, like PyTorch); slab: pre-packed weights.
    Returns (last_hidden, recon)."""
    b, t, _ = x.shape
    H = HIDDEN
    # time-major + flatten: row (step * b + i) corresponds to (timestep step, batch i)
    x_flat = jnp.transpose(x, (1, 0, 2)).reshape(t * b, 1).astype(jnp.float32)

    vmem = pl.BlockSpec(memory_space=pltpu.MemorySpace.VMEM)
    out = pl.pallas_call(
        lstm_ae_kernel,
        out_shape=jax.ShapeDtypeStruct((b, 2 * H), jnp.float32),
        in_specs=[vmem, vmem],
        out_specs=vmem,
    )(x_flat, slab)
    return out[:, :H], out[:, H:]


# ----------------------------- parameters & reference --------------------------
def init_params(key):
    """Deterministic synthetic parameters matching the PyTorch module's shapes.
    Matrices are stored pre-transposed to (in_features, out_features); LSTM gate
    order on the 4H axis is PyTorch's (i, f, g, o); b0/b1 = bias_ih + bias_hh."""
    H = HIDDEN
    stdv = 1.0 / jnp.sqrt(H)

    def uni(k, shape, scale):
        return jax.random.uniform(k, shape, jnp.float32, -scale, scale)

    keys = jax.random.split(key, 20)
    p = {}
    p["wih0"] = uni(keys[0], (1, 4 * H), stdv)
    p["whh0"] = uni(keys[1], (H, 4 * H), stdv)
    p["b0"] = uni(keys[2], (1, 4 * H), stdv) + uni(keys[3], (1, 4 * H), stdv)
    p["wih1"] = uni(keys[4], (H, 4 * H), stdv)
    p["whh1"] = uni(keys[5], (H, 4 * H), stdv)
    p["b1"] = uni(keys[6], (1, 4 * H), stdv) + uni(keys[7], (1, 4 * H), stdv)
    s1 = 1.0 / jnp.sqrt(H)
    p["we1"] = uni(keys[8], (H, H // 4), s1)
    p["be1"] = uni(keys[9], (1, H // 4), s1)
    s2 = 1.0 / jnp.sqrt(H // 4)
    p["we2"] = uni(keys[10], (H // 4, H // 8), s2)
    p["be2"] = uni(keys[11], (1, H // 8), s2)
    s3 = 1.0 / jnp.sqrt(H // 8)
    p["wd1"] = uni(keys[12], (H // 8, H // 4), s3)
    p["bd1"] = uni(keys[13], (1, H // 4), s3)
    s4 = 1.0 / jnp.sqrt(H // 4)
    p["wd2"] = uni(keys[14], (H // 4, H), s4)
    p["bd2"] = uni(keys[15], (1, H), s4)
    return p


def reference_forward(x, params):
    """Pure-JAX reference with the original (unpermuted, unfused) parameters."""
    H = HIDDEN
    b, t, _ = x.shape
    hp = jax.lax.Precision.HIGHEST
    mm = lambda a, w: jnp.dot(a, w, precision=hp)
    h0 = c0 = h1 = c1 = jnp.zeros((b, H), jnp.float32)

    def cell(gates, c):
        i = jax.nn.sigmoid(gates[:, 0 * H:1 * H])
        f = jax.nn.sigmoid(gates[:, 1 * H:2 * H])
        g = jnp.tanh(gates[:, 2 * H:3 * H])
        o = jax.nn.sigmoid(gates[:, 3 * H:4 * H])
        c_new = f * c + i * g
        return o * jnp.tanh(c_new), c_new

    for step in range(t):
        x_t = x[:, step, :]
        g0 = x_t * params["wih0"] + mm(h0, params["whh0"]) + params["b0"]
        h0, c0 = cell(g0, c0)
        g1 = mm(h0, params["wih1"]) + mm(h1, params["whh1"]) + params["b1"]
        h1, c1 = cell(g1, c1)

    z = jnp.maximum(mm(h1, params["we1"]) + params["be1"], 0.0)
    z = jnp.maximum(mm(z, params["we2"]) + params["be2"], 0.0)
    r = jnp.maximum(mm(z, params["wd1"]) + params["bd1"], 0.0)
    r = mm(r, params["wd2"]) + params["bd2"]
    return h1, r


if __name__ == "__main__":
    key = jax.random.PRNGKey(0)
    k_param, k_x = jax.random.split(key)
    params = init_params(k_param)
    x = jax.random.normal(k_x, (B, T, 1), dtype=jnp.float32)   # batch-first, input_size=1

    # Weights are packed ONCE, outside the per-call path (perf feedback).
    slab = jax.device_put(pack_params(params))

    fwd = jax.jit(model_handler_forward)
    last_hidden, recon = fwd(x, slab)
    jax.block_until_ready((last_hidden, recon))

    ref_h, ref_r = reference_forward(x, params)

    assert last_hidden.shape == (B, HIDDEN)
    assert recon.shape == (B, HIDDEN)
    assert bool(jnp.all(jnp.isfinite(last_hidden))) and bool(jnp.all(jnp.isfinite(recon)))
    assert jnp.allclose(last_hidden, ref_h, atol=1e-3, rtol=1e-3)
    assert jnp.allclose(recon, ref_r, atol=1e-3, rtol=1e-3)
    print("KERNEL_OK")
</pallas_src>

<mosaic_0001>
module attributes {stable_mosaic.version = 11 : i64} {
  func.func @lstm_ae_kernel(%arg0: memref<16x1xf32, #tpu.memory_space<vmem>>, %arg1: memref<216x256xf32, #tpu.memory_space<vmem>>, %arg2: memref<2x64xf32, #tpu.memory_space<vmem>>) attributes {dimension_semantics = [], scalar_prefetch = 0 : i64, scratch_operands = 0 : i64, tpu.core_type = #tpu.core_type<tc>} {
    %c0 = arith.constant 0 : index
    %c0_0 = arith.constant 0 : index
    %0 = vector.load %arg1[%c0, %c0_0] : memref<216x256xf32, #tpu.memory_space<vmem>>, vector<64x256xf32>
    %c64 = arith.constant 64 : index
    %c0_1 = arith.constant 0 : index
    %1 = vector.load %arg1[%c64, %c0_1] : memref<216x256xf32, #tpu.memory_space<vmem>>, vector<1x256xf32>
    %c72 = arith.constant 72 : index
    %c0_2 = arith.constant 0 : index
    %2 = vector.load %arg1[%c72, %c0_2] : memref<216x256xf32, #tpu.memory_space<vmem>>, vector<1x256xf32>
    %c0_3 = arith.constant 0 : index
    %c0_4 = arith.constant 0 : index
    %3 = vector.load %arg0[%c0_3, %c0_4] : memref<16x1xf32, #tpu.memory_space<vmem>>, vector<16x1xf32>
    %4 = vector.broadcast %3 : vector<16x1xf32> to vector<16x256xf32>
    %5 = vector.broadcast %1 : vector<1x256xf32> to vector<16x256xf32>
    %6 = arith.mulf %4, %5 : vector<16x256xf32>
    %7 = vector.broadcast %2 : vector<1x256xf32> to vector<16x256xf32>
    %8 = arith.addf %6, %7 : vector<16x256xf32>
    %9 = tpu.iota {dimensions = array<i32: 1>} : vector<2x64xi32>
    %cst = arith.constant 0.000000e+00 : f32
    %10 = vector.broadcast %cst : f32 to vector<2x64xf32>
    %11 = vector.extract_strided_slice %8 {offsets = [0, 0], sizes = [2, 256], strides = [1, 1]} : vector<16x256xf32> to vector<2x256xf32>
    %12 = vector.extract_strided_slice %11 {offsets = [0, 0], sizes = [2, 192], strides = [1, 1]} : vector<2x256xf32> to vector<2x192xf32>
    %13 = arith.negf %12 : vector<2x192xf32>
    %14 = math.exp %13 : vector<2x192xf32>
    %cst_5 = arith.constant 1.000000e+00 : f32
    %15 = vector.broadcast %cst_5 : f32 to vector<2x192xf32>
    %16 = arith.addf %15, %14 : vector<2x192xf32>
    %17 = arith.divf %15, %16 : vector<2x192xf32>
    %18 = vector.extract_strided_slice %11 {offsets = [0, 192], sizes = [2, 64], strides = [1, 1]} : vector<2x256xf32> to vector<2x64xf32>
    %19 = math.tanh %18 : vector<2x64xf32>
    %20 = vector.extract_strided_slice %17 {offsets = [0, 0], sizes = [2, 64], strides = [1, 1]} : vector<2x192xf32> to vector<2x64xf32>
    %21 = vector.extract_strided_slice %17 {offsets = [0, 64], sizes = [2, 64], strides = [1, 1]} : vector<2x192xf32> to vector<2x64xf32>
    %22 = vector.extract_strided_slice %17 {offsets = [0, 128], sizes = [2, 64], strides = [1, 1]} : vector<2x192xf32> to vector<2x64xf32>
    %23 = arith.mulf %21, %10 : vector<2x64xf32>
    %24 = arith.mulf %20, %19 : vector<2x64xf32>
    %25 = arith.addf %23, %24 : vector<2x64xf32>
    %26 = math.tanh %25 : vector<2x64xf32>
    %27 = arith.mulf %22, %26 : vector<2x64xf32>
    %c32_i32 = arith.constant 32 : i32
    %28 = vector.broadcast %c32_i32 : i32 to vector<2x64xi32>
    %29 = arith.cmpi slt, %9, %28 : vector<2x64xi32>
    %cst_6 = arith.constant 0.000000e+00 : f32
    %30 = vector.broadcast %cst_6 : f32 to vector<2x64xf32>
    %31 = arith.select %29, %27, %30 : vector<2x64xi1>, vector<2x64xf32>
    %c32_i32_7 = arith.constant 32 : i32
    %32 = vector.broadcast %c32_i32_7 : i32 to vector<2x64xi32>
    %33 = arith.cmpi slt, %9, %32 : vector<2x64xi32>
    %cst_8 = arith.constant 0.000000e+00 : f32
    %34 = vector.broadcast %cst_8 : f32 to vector<2x64xf32>
    %35 = arith.select %33, %25, %34 : vector<2x64xi1>, vector<2x64xf32>
    %cst_9 = arith.constant dense<0.000000e+00> : vector<2x256xf32>
    %36 = tpu.matmul %31, %0, %cst_9 {dimension_numbers = #tpu.dot_dimension_numbers<[1], [0], [0], [1], [0, 0, 1, 1], [], []>} : vector<2x64xf32>, vector<64x256xf32>, vector<2x256xf32> -> vector<2x256xf32>
    %37 = vector.extract_strided_slice %8 {offsets = [2, 0], sizes = [2, 256], strides = [1, 1]} : vector<16x256xf32> to vector<2x256xf32>
    %38 = arith.addf %36, %37 : vector<2x256xf32>
    %39 = vector.extract_strided_slice %38 {offsets = [0, 0], sizes = [2, 192], strides = [1, 1]} : vector<2x256xf32> to vector<2x192xf32>
    %40 = arith.negf %39 : vector<2x192xf32>
    %41 = math.exp %40 : vector<2x192xf32>
    %cst_10 = arith.constant 1.000000e+00 : f32
    %42 = vector.broadcast %cst_10 : f32 to vector<2x192xf32>
    %43 = arith.addf %42, %41 : vector<2x192xf32>
    %44 = arith.divf %42, %43 : vector<2x192xf32>
    %45 = vector.extract_strided_slice %38 {offsets = [0, 192], sizes = [2, 64], strides = [1, 1]} : vector<2x256xf32> to vector<2x64xf32>
    %46 = math.tanh %45 : vector<2x64xf32>
    %47 = vector.extract_strided_slice %44 {offsets = [0, 0], sizes = [2, 64], strides = [1, 1]} : vector<2x192xf32> to vector<2x64xf32>
    %48 = vector.extract_strided_slice %44 {offsets = [0, 64], sizes = [2, 64], strides = [1, 1]} : vector<2x192xf32> to vector<2x64xf32>
    %49 = vector.extract_strided_slice %44 {offsets = [0, 128], sizes = [2, 64], strides = [1, 1]} : vector<2x192xf32> to vector<2x64xf32>
    %50 = arith.mulf %48, %35 : vector<2x64xf32>
    %51 = arith.mulf %47, %46 : vector<2x64xf32>
    %52 = arith.addf %50, %51 : vector<2x64xf32>
    %53 = math.tanh %52 : vector<2x64xf32>
    %54 = arith.mulf %49, %53 : vector<2x64xf32>
    %cst_11 = arith.constant dense<0.000000e+00> : vector<2x256xf32>
    %55 = tpu.matmul %54, %0, %cst_11 {dimension_numbers = #tpu.dot_dimension_numbers<[1], [0], [0], [1], [0, 0, 1, 1], [], []>} : vector<2x64xf32>, vector<64x256xf32>, vector<2x256xf32> -> vector<2x256xf32>
    %56 = vector.extract_strided_slice %8 {offsets = [4, 0], sizes = [2, 256], strides = [1, 1]} : vector<16x256xf32> to vector<2x256xf32>
    %57 = arith.addf %55, %56 : vector<2x256xf32>
    %58 = vector.extract_strided_slice %57 {offsets = [0, 0], sizes = [2, 192], strides = [1, 1]} : vector<2x256xf32> to vector<2x192xf32>
    %59 = arith.negf %58 : vector<2x192xf32>
    %60 = math.exp %59 : vector<2x192xf32>
    %cst_12 = arith.constant 1.000000e+00 : f32
    %61 = vector.broadcast %cst_12 : f32 to vector<2x192xf32>
    %62 = arith.addf %61, %60 : vector<2x192xf32>
    %63 = arith.divf %61, %62 : vector<2x192xf32>
    %64 = vector.extract_strided_slice %57 {offsets = [0, 192], sizes = [2, 64], strides = [1, 1]} : vector<2x256xf32> to vector<2x64xf32>
    %65 = math.tanh %64 : vector<2x64xf32>
    %66 = vector.extract_strided_slice %63 {offsets = [0, 0], sizes = [2, 64], strides = [1, 1]} : vector<2x192xf32> to vector<2x64xf32>
    %67 = vector.extract_strided_slice %63 {offsets = [0, 64], sizes = [2, 64], strides = [1, 1]} : vector<2x192xf32> to vector<2x64xf32>
    %68 = vector.extract_strided_slice %63 {offsets = [0, 128], sizes = [2, 64], strides = [1, 1]} : vector<2x192xf32> to vector<2x64xf32>
    %69 = arith.mulf %67, %52 : vector<2x64xf32>
    %70 = arith.mulf %66, %65 : vector<2x64xf32>
    %71 = arith.addf %69, %70 : vector<2x64xf32>
    %72 = math.tanh %71 : vector<2x64xf32>
    %73 = arith.mulf %68, %72 : vector<2x64xf32>
    %cst_13 = arith.constant dense<0.000000e+00> : vector<2x256xf32>
    %74 = tpu.matmul %73, %0, %cst_13 {dimension_numbers = #tpu.dot_dimension_numbers<[1], [0], [0], [1], [0, 0, 1, 1], [], []>} : vector<2x64xf32>, vector<64x256xf32>, vector<2x256xf32> -> vector<2x256xf32>
    %75 = vector.extract_strided_slice %8 {offsets = [6, 0], sizes = [2, 256], strides = [1, 1]} : vector<16x256xf32> to vector<2x256xf32>
    %76 = arith.addf %74, %75 : vector<2x256xf32>
    %77 = vector.extract_strided_slice %76 {offsets = [0, 0], sizes = [2, 192], strides = [1, 1]} : vector<2x256xf32> to vector<2x192xf32>
    %78 = arith.negf %77 : vector<2x192xf32>
    %79 = math.exp %78 : vector<2x192xf32>
    %cst_14 = arith.constant 1.000000e+00 : f32
    %80 = vector.broadcast %cst_14 : f32 to vector<2x192xf32>
    %81 = arith.addf %80, %79 : vector<2x192xf32>
    %82 = arith.divf %80, %81 : vector<2x192xf32>
    %83 = vector.extract_strided_slice %76 {offsets = [0, 192], sizes = [2, 64], strides = [1, 1]} : vector<2x256xf32> to vector<2x64xf32>
    %84 = math.tanh %83 : vector<2x64xf32>
    %85 = vector.extract_strided_slice %82 {offsets = [0, 0], sizes = [2, 64], strides = [1, 1]} : vector<2x192xf32> to vector<2x64xf32>
    %86 = vector.extract_strided_slice %82 {offsets = [0, 64], sizes = [2, 64], strides = [1, 1]} : vector<2x192xf32> to vector<2x64xf32>
    %87 = vector.extract_strided_slice %82 {offsets = [0, 128], sizes = [2, 64], strides = [1, 1]} : vector<2x192xf32> to vector<2x64xf32>
    %88 = arith.mulf %86, %71 : vector<2x64xf32>
    %89 = arith.mulf %85, %84 : vector<2x64xf32>
    %90 = arith.addf %88, %89 : vector<2x64xf32>
    %91 = math.tanh %90 : vector<2x64xf32>
    %92 = arith.mulf %87, %91 : vector<2x64xf32>
    %cst_15 = arith.constant dense<0.000000e+00> : vector<2x256xf32>
    %93 = tpu.matmul %92, %0, %cst_15 {dimension_numbers = #tpu.dot_dimension_numbers<[1], [0], [0], [1], [0, 0, 1, 1], [], []>} : vector<2x64xf32>, vector<64x256xf32>, vector<2x256xf32> -> vector<2x256xf32>
    %94 = vector.extract_strided_slice %8 {offsets = [8, 0], sizes = [2, 256], strides = [1, 1]} : vector<16x256xf32> to vector<2x256xf32>
    %95 = arith.addf %93, %94 : vector<2x256xf32>
    %96 = vector.extract_strided_slice %95 {offsets = [0, 0], sizes = [2, 192], strides = [1, 1]} : vector<2x256xf32> to vector<2x192xf32>
    %97 = arith.negf %96 : vector<2x192xf32>
    %98 = math.exp %97 : vector<2x192xf32>
    %cst_16 = arith.constant 1.000000e+00 : f32
    %99 = vector.broadcast %cst_16 : f32 to vector<2x192xf32>
    %100 = arith.addf %99, %98 : vector<2x192xf32>
    %101 = arith.divf %99, %100 : vector<2x192xf32>
    %102 = vector.extract_strided_slice %95 {offsets = [0, 192], sizes = [2, 64], strides = [1, 1]} : vector<2x256xf32> to vector<2x64xf32>
    %103 = math.tanh %102 : vector<2x64xf32>
    %104 = vector.extract_strided_slice %101 {offsets = [0, 0], sizes = [2, 64], strides = [1, 1]} : vector<2x192xf32> to vector<2x64xf32>
    %105 = vector.extract_strided_slice %101 {offsets = [0, 64], sizes = [2, 64], strides = [1, 1]} : vector<2x192xf32> to vector<2x64xf32>
    %106 = vector.extract_strided_slice %101 {offsets = [0, 128], sizes = [2, 64], strides = [1, 1]} : vector<2x192xf32> to vector<2x64xf32>
    %107 = arith.mulf %105, %90 : vector<2x64xf32>
    %108 = arith.mulf %104, %103 : vector<2x64xf32>
    %109 = arith.addf %107, %108 : vector<2x64xf32>
    %110 = math.tanh %109 : vector<2x64xf32>
    %111 = arith.mulf %106, %110 : vector<2x64xf32>
    %cst_17 = arith.constant dense<0.000000e+00> : vector<2x256xf32>
    %112 = tpu.matmul %111, %0, %cst_17 {dimension_numbers = #tpu.dot_dimension_numbers<[1], [0], [0], [1], [0, 0, 1, 1], [], []>} : vector<2x64xf32>, vector<64x256xf32>, vector<2x256xf32> -> vector<2x256xf32>
    %113 = vector.extract_strided_slice %8 {offsets = [10, 0], sizes = [2, 256], strides = [1, 1]} : vector<16x256xf32> to vector<2x256xf32>
    %114 = arith.addf %112, %113 : vector<2x256xf32>
    %115 = vector.extract_strided_slice %114 {offsets = [0, 0], sizes = [2, 192], strides = [1, 1]} : vector<2x256xf32> to vector<2x192xf32>
    %116 = arith.negf %115 : vector<2x192xf32>
    %117 = math.exp %116 : vector<2x192xf32>
    %cst_18 = arith.constant 1.000000e+00 : f32
    %118 = vector.broadcast %cst_18 : f32 to vector<2x192xf32>
    %119 = arith.addf %118, %117 : vector<2x192xf32>
    %120 = arith.divf %118, %119 : vector<2x192xf32>
    %121 = vector.extract_strided_slice %114 {offsets = [0, 192], sizes = [2, 64], strides = [1, 1]} : vector<2x256xf32> to vector<2x64xf32>
    %122 = math.tanh %121 : vector<2x64xf32>
    %123 = vector.extract_strided_slice %120 {offsets = [0, 0], sizes = [2, 64], strides = [1, 1]} : vector<2x192xf32> to vector<2x64xf32>
    %124 = vector.extract_strided_slice %120 {offsets = [0, 64], sizes = [2, 64], strides = [1, 1]} : vector<2x192xf32> to vector<2x64xf32>
    %125 = vector.extract_strided_slice %120 {offsets = [0, 128], sizes = [2, 64], strides = [1, 1]} : vector<2x192xf32> to vector<2x64xf32>
    %126 = arith.mulf %124, %109 : vector<2x64xf32>
    %127 = arith.mulf %123, %122 : vector<2x64xf32>
    %128 = arith.addf %126, %127 : vector<2x64xf32>
    %129 = math.tanh %128 : vector<2x64xf32>
    %130 = arith.mulf %125, %129 : vector<2x64xf32>
    %cst_19 = arith.constant dense<0.000000e+00> : vector<2x256xf32>
    %131 = tpu.matmul %130, %0, %cst_19 {dimension_numbers = #tpu.dot_dimension_numbers<[1], [0], [0], [1], [0, 0, 1, 1], [], []>} : vector<2x64xf32>, vector<64x256xf32>, vector<2x256xf32> -> vector<2x256xf32>
    %132 = vector.extract_strided_slice %8 {offsets = [12, 0], sizes = [2, 256], strides = [1, 1]} : vector<16x256xf32> to vector<2x256xf32>
    %133 = arith.addf %131, %132 : vector<2x256xf32>
    %134 = vector.extract_strided_slice %133 {offsets = [0, 0], sizes = [2, 192], strides = [1, 1]} : vector<2x256xf32> to vector<2x192xf32>
    %135 = arith.negf %134 : vector<2x192xf32>
    %136 = math.exp %135 : vector<2x192xf32>
    %cst_20 = arith.constant 1.000000e+00 : f32
    %137 = vector.broadcast %cst_20 : f32 to vector<2x192xf32>
    %138 = arith.addf %137, %136 : vector<2x192xf32>
    %139 = arith.divf %137, %138 : vector<2x192xf32>
    %140 = vector.extract_strided_slice %133 {offsets = [0, 192], sizes = [2, 64], strides = [1, 1]} : vector<2x256xf32> to vector<2x64xf32>
    %141 = math.tanh %140 : vector<2x64xf32>
    %142 = vector.extract_strided_slice %139 {offsets = [0, 0], sizes = [2, 64], strides = [1, 1]} : vector<2x192xf32> to vector<2x64xf32>
    %143 = vector.extract_strided_slice %139 {offsets = [0, 64], sizes = [2, 64], strides = [1, 1]} : vector<2x192xf32> to vector<2x64xf32>
    %144 = vector.extract_strided_slice %139 {offsets = [0, 128], sizes = [2, 64], strides = [1, 1]} : vector<2x192xf32> to vector<2x64xf32>
    %145 = arith.mulf %143, %128 : vector<2x64xf32>
    %146 = arith.mulf %142, %141 : vector<2x64xf32>
    %147 = arith.addf %145, %146 : vector<2x64xf32>
    %148 = math.tanh %147 : vector<2x64xf32>
    %149 = arith.mulf %144, %148 : vector<2x64xf32>
    %cst_21 = arith.constant dense<0.000000e+00> : vector<2x256xf32>
    %150 = tpu.matmul %149, %0, %cst_21 {dimension_numbers = #tpu.dot_dimension_numbers<[1], [0], [0], [1], [0, 0, 1, 1], [], []>} : vector<2x64xf32>, vector<64x256xf32>, vector<2x256xf32> -> vector<2x256xf32>
    %151 = vector.extract_strided_slice %8 {offsets = [14, 0], sizes = [2, 256], strides = [1, 1]} : vector<16x256xf32> to vector<2x256xf32>
    %152 = arith.addf %150, %151 : vector<2x256xf32>
    %153 = vector.extract_strided_slice %152 {offsets = [0, 0], sizes = [2, 192], strides = [1, 1]} : vector<2x256xf32> to vector<2x192xf32>
    %154 = arith.negf %153 : vector<2x192xf32>
    %155 = math.exp %154 : vector<2x192xf32>
    %cst_22 = arith.constant 1.000000e+00 : f32
    %156 = vector.broadcast %cst_22 : f32 to vector<2x192xf32>
    %157 = arith.addf %156, %155 : vector<2x192xf32>
    %158 = arith.divf %156, %157 : vector<2x192xf32>
    %159 = vector.extract_strided_slice %152 {offsets = [0, 192], sizes = [2, 64], strides = [1, 1]} : vector<2x256xf32> to vector<2x64xf32>
    %160 = math.tanh %159 : vector<2x64xf32>
    %161 = vector.extract_strided_slice %158 {offsets = [0, 0], sizes = [2, 64], strides = [1, 1]} : vector<2x192xf32> to vector<2x64xf32>
    %162 = vector.extract_strided_slice %158 {offsets = [0, 64], sizes = [2, 64], strides = [1, 1]} : vector<2x192xf32> to vector<2x64xf32>
    %163 = vector.extract_strided_slice %158 {offsets = [0, 128], sizes = [2, 64], strides = [1, 1]} : vector<2x192xf32> to vector<2x64xf32>
    %164 = arith.mulf %162, %147 : vector<2x64xf32>
    %165 = arith.mulf %161, %160 : vector<2x64xf32>
    %166 = arith.addf %164, %165 : vector<2x64xf32>
    %167 = math.tanh %166 : vector<2x64xf32>
    %168 = arith.mulf %163, %167 : vector<2x64xf32>
    %cst_23 = arith.constant dense<0.000000e+00> : vector<2x256xf32>
    %169 = tpu.matmul %168, %0, %cst_23 {dimension_numbers = #tpu.dot_dimension_numbers<[1], [0], [0], [1], [0, 0, 1, 1], [], []>} : vector<2x64xf32>, vector<64x256xf32>, vector<2x256xf32> -> vector<2x256xf32>
    %170 = vector.broadcast %2 : vector<1x256xf32> to vector<2x256xf32>
    %171 = arith.addf %169, %170 : vector<2x256xf32>
    %172 = vector.extract_strided_slice %171 {offsets = [0, 0], sizes = [2, 192], strides = [1, 1]} : vector<2x256xf32> to vector<2x192xf32>
    %173 = arith.negf %172 : vector<2x192xf32>
    %174 = math.exp %173 : vector<2x192xf32>
    %cst_24 = arith.constant 1.000000e+00 : f32
    %175 = vector.broadcast %cst_24 : f32 to vector<2x192xf32>
    %176 = arith.addf %175, %174 : vector<2x192xf32>
    %177 = arith.divf %175, %176 : vector<2x192xf32>
    %178 = vector.extract_strided_slice %171 {offsets = [0, 192], sizes = [2, 64], strides = [1, 1]} : vector<2x256xf32> to vector<2x64xf32>
    %179 = math.tanh %178 : vector<2x64xf32>
    %180 = vector.extract_strided_slice %177 {offsets = [0, 0], sizes = [2, 64], strides = [1, 1]} : vector<2x192xf32> to vector<2x64xf32>
    %181 = vector.extract_strided_slice %177 {offsets = [0, 64], sizes = [2, 64], strides = [1, 1]} : vector<2x192xf32> to vector<2x64xf32>
    %182 = vector.extract_strided_slice %177 {offsets = [0, 128], sizes = [2, 64], strides = [1, 1]} : vector<2x192xf32> to vector<2x64xf32>
    %183 = arith.mulf %181, %166 : vector<2x64xf32>
    %184 = arith.mulf %180, %179 : vector<2x64xf32>
    %185 = arith.addf %183, %184 : vector<2x64xf32>
    %186 = math.tanh %185 : vector<2x64xf32>
    %187 = arith.mulf %182, %186 : vector<2x64xf32>
    %188 = vector.extract_strided_slice %187 {offsets = [0, 32], sizes = [2, 32], strides = [1, 1]} : vector<2x64xf32> to vector<2x32xf32>
    %c80 = arith.constant 80 : index
    %c0_25 = arith.constant 0 : index
    %189 = vector.load %arg1[%c80, %c0_25] : memref<216x256xf32, #tpu.memory_space<vmem>>, vector<32x32xf32>
    %c112 = arith.constant 112 : index
    %c0_26 = arith.constant 0 : index
    %190 = vector.load %arg1[%c112, %c0_26] : memref<216x256xf32, #tpu.memory_space<vmem>>, vector<32x32xf32>
    %c144 = arith.constant 144 : index
    %c0_27 = arith.constant 0 : index
    %191 = vector.load %arg1[%c144, %c0_27] : memref<216x256xf32, #tpu.memory_space<vmem>>, vector<32x32xf32>
    %c176 = arith.constant 176 : index
    %c0_28 = arith.constant 0 : index
    %192 = vector.load %arg1[%c176, %c0_28] : memref<216x256xf32, #tpu.memory_space<vmem>>, vector<32x32xf32>
    %c208 = arith.constant 208 : index
    %c0_29 = arith.constant 0 : index
    %193 = vector.load %arg1[%c208, %c0_29] : memref<216x256xf32, #tpu.memory_space<vmem>>, vector<1x256xf32>
    %194 = vector.extract_strided_slice %193 {offsets = [0, 0], sizes = [1, 32], strides = [1, 1]} : vector<1x256xf32> to vector<1x32xf32>
    %195 = vector.extract_strided_slice %193 {offsets = [0, 32], sizes = [1, 32], strides = [1, 1]} : vector<1x256xf32> to vector<1x32xf32>
    %196 = vector.extract_strided_slice %193 {offsets = [0, 64], sizes = [1, 32], strides = [1, 1]} : vector<1x256xf32> to vector<1x32xf32>
    %197 = vector.extract_strided_slice %193 {offsets = [0, 96], sizes = [1, 32], strides = [1, 1]} : vector<1x256xf32> to vector<1x32xf32>
    %cst_30 = arith.constant dense<0.000000e+00> : vector<2x32xf32>
    %198 = tpu.matmul %188, %189, %cst_30 {dimension_numbers = #tpu.dot_dimension_numbers<[1], [0], [0], [1], [0, 0, 1, 1], [], []>} : vector<2x32xf32>, vector<32x32xf32>, vector<2x32xf32> -> vector<2x32xf32>
    %199 = vector.broadcast %194 : vector<1x32xf32> to vector<2x32xf32>
    %200 = arith.addf %198, %199 : vector<2x32xf32>
    %cst_31 = arith.constant 0.000000e+00 : f32
    %201 = vector.broadcast %cst_31 : f32 to vector<2x32xf32>
    %202 = arith.maximumf %200, %201 : vector<2x32xf32>
    %cst_32 = arith.constant dense<0.000000e+00> : vector<2x32xf32>
    %203 = tpu.matmul %202, %190, %cst_32 {dimension_numbers = #tpu.dot_dimension_numbers<[1], [0], [0], [1], [0, 0, 1, 1], [], []>} : vector<2x32xf32>, vector<32x32xf32>, vector<2x32xf32> -> vector<2x32xf32>
    %204 = vector.broadcast %195 : vector<1x32xf32> to vector<2x32xf32>
    %205 = arith.addf %203, %204 : vector<2x32xf32>
    %cst_33 = arith.constant 0.000000e+00 : f32
    %206 = vector.broadcast %cst_33 : f32 to vector<2x32xf32>
    %207 = arith.maximumf %205, %206 : vector<2x32xf32>
    %cst_34 = arith.constant dense<0.000000e+00> : vector<2x32xf32>
    %208 = tpu.matmul %207, %191, %cst_34 {dimension_numbers = #tpu.dot_dimension_numbers<[1], [0], [0], [1], [0, 0, 1, 1], [], []>} : vector<2x32xf32>, vector<32x32xf32>, vector<2x32xf32> -> vector<2x32xf32>
    %209 = vector.broadcast %196 : vector<1x32xf32> to vector<2x32xf32>
    %210 = arith.addf %208, %209 : vector<2x32xf32>
    %cst_35 = arith.constant 0.000000e+00 : f32
    %211 = vector.broadcast %cst_35 : f32 to vector<2x32xf32>
    %212 = arith.maximumf %210, %211 : vector<2x32xf32>
    %cst_36 = arith.constant dense<0.000000e+00> : vector<2x32xf32>
    %213 = tpu.matmul %212, %192, %cst_36 {dimension_numbers = #tpu.dot_dimension_numbers<[1], [0], [0], [1], [0, 0, 1, 1], [], []>} : vector<2x32xf32>, vector<32x32xf32>, vector<2x32xf32> -> vector<2x32xf32>
    %214 = vector.broadcast %197 : vector<1x32xf32> to vector<2x32xf32>
    %215 = arith.addf %213, %214 : vector<2x32xf32>
    %216 = tpu.concatenate %188, %215 in 1 : vector<2x32xf32>, vector<2x32xf32> -> vector<2x64xf32>
    %c0_37 = arith.constant 0 : index
    %c0_38 = arith.constant 0 : index
    %217 = vector.load %arg2[%c0_37, %c0_38] : memref<2x64xf32, #tpu.memory_space<vmem>>, vector<2x64xf32>
    tpu.vector_store %arg2[%c0_37, %c0_38], %216 {strides = array<i32>} : memref<2x64xf32, #tpu.memory_space<vmem>>, vector<2x64xf32>,
    return
  }
}

</mosaic_0001>

<llo_original>
// kernel: model_handler_forward.1
$region0: #{model_handler_forward.1}
  #allocation0 [shape = 'u32[]', space=smem, size = 0x4, offset = 0x4, fixed_abs, tag = 'smem constant byte address 0x4 - core index']
  #allocation1 [shape = 'u32[144,128]{1,0:T(1,128)}', space=vmem, size = 0x12000, scoped, tag = 'internal scratch']
  %s0 = inlined_call_operand.vmem [shape: f32[16,1], index: 0, kind: input, shape index: {}]
  %s1 = inlined_call_operand.hbm [shape: f32[216,256], index: 1, kind: input, shape index: {}]
  %s2 = inlined_call_operand.vmem [shape: f32[2,64], index: 2, kind: output, shape index: {}]
  %s3 = sld [smem:[#allocation0]]
  $region22: #{model_handler_forward.1} parent=0
    _
  %s5 = ssub.s32 1, %s3
  %s6 = scalar_select 0, %s5, %s3
  $region1: #{model_handler_forward.1} parent=0
    #allocation2 [shape = 'u8[221184]{0}', space=vmem, size = 0x36000, scoped, tag = 'input window, operand 1, single buffered']
    #allocation3 [shape = 's32[1]{0}', space=sflag, size = 0x4, scoped, tag = 'scoped memory for model_handler_forward.1']
    %7 = vsyncpa [#allocation3], 0
    // Predicated region
    $region2: #{model_handler_forward.1} parent=1 // pred_check
      _
    $region3: #{model_handler_forward.1} parent=1 // pred_check_branch
      %9 = sbr.rel (0) target = $region5
    $region4: #{model_handler_forward.1} parent=1 // pred_region
      _
    $region5: #{model_handler_forward.1} parent=1 // pred_fallthru
      _
    // Predicated region
    $region6: #{model_handler_forward.1} parent=1 // pred_check
      _
    $region7: #{model_handler_forward.1} parent=1 // pred_check_branch
      %11 = sbr.rel (0) target = $region9
    $region8: #{model_handler_forward.1} parent=1 // pred_region
      %s13 = ssub.s32 6912, 6912
      %14 = vsyncadd [#allocation3], %s13
      %s15 = sshll.u32 [#allocation2], 4
      %s16 = int_to_ptr.vmem [resolvable:$true] %s15
      %21 = dma.hbm_to_vmem [thread:$0]  %s1, 6912, %s16, [#allocation3], 256, 256, 16
    $region9: #{model_handler_forward.1} parent=1 // pred_fallthru
      _
    // Predicated region
    $region10: #{model_handler_forward.1} parent=1 // pred_check
      _
    $region11: #{model_handler_forward.1} parent=1 // pred_check_branch
      %23 = sbr.rel (0) target = $region13
    $region12: #{model_handler_forward.1} parent=1 // pred_region
      %24 = dma.done [#allocation3], 6912
    $region13: #{model_handler_forward.1} parent=1 // pred_fallthru
      _
    %v25 = vld [vmem:[#allocation2] sm:$0xff]
    %v26 = vld [vmem:[#allocation2 + $0x8] sm:$0xff]
    %v27 = vld [vmem:[#allocation2 + $0x10] sm:$0xff]
    %v28 = vld [vmem:[#allocation2 + $0x18] sm:$0xff]
    %v29 = vld [vmem:[#allocation2 + $0x20] sm:$0xff]
    %v30 = vld [vmem:[#allocation2 + $0x28] sm:$0xff]
    %v31 = vld [vmem:[#allocation2 + $0x30] sm:$0xff]
    %v32 = vld [vmem:[#allocation2 + $0x38] sm:$0xff]
    %v33 = vld [vmem:[#allocation2 + $0x40] sm:$0xff]
    %v34 = vld [vmem:[#allocation2 + $0x48] sm:$0xff]
    %v35 = vld [vmem:[#allocation2 + $0x50] sm:$0xff]
    %v36 = vld [vmem:[#allocation2 + $0x58] sm:$0xff]
    %v37 = vld [vmem:[#allocation2 + $0x60] sm:$0xff]
    %v38 = vld [vmem:[#allocation2 + $0x68] sm:$0xff]
    %v39 = vld [vmem:[#allocation2 + $0x70] sm:$0xff]
    %v40 = vld [vmem:[#allocation2 + $0x78] sm:$0xff]
    %s41 = scalar_lea.vmem [#allocation2], 128
    %v42 = vld [vmem:[%s41] ss:$8 sm:$0x3]
    %s43 = scalar_lea.vmem [#allocation2], 144
    %v44 = vld [vmem:[%s43] ss:$8 sm:$0x3]
    %v45 = vld [vmem:[%s0] sm:$0xff]
    %v46 = vld [vmem:[%s0 + $0x8] sm:$0xff]
    %48 = vset.pattern.permute.xlu0 0
    %49 = vperm.xlu0 %48, %v45
    %v50 = vpop.permute.xlu0 %49
    %53 = vset.pattern.permute.xlu0 0
    %54 = vperm.xlu0 %53, %v46
    %v55 = vpop.permute.xlu0 %54
    %v58 = vlaneseq
    %v59 = vshrl.u32 %v58, 7
    %v60 = vsub.s32 0, %v59
    %v61 = vrot.slane %v42, %v60
    %v62 = vlaneseq
    %v63 = vshrl.u32 %v62, 7
    %v64 = vsub.s32 1, %v63
    %v65 = vrot.slane %v42, %v64
    %v68 = vmul.f32 %v50, %v61
    %v69 = vmul.f32 %v50, %v65
    %v70 = vmul.f32 %v55, %v61
    %v71 = vmul.f32 %v55, %v65
    %v73 = vlaneseq
    %v74 = vshrl.u32 %v73, 7
    %v75 = vsub.s32 0, %v74
    %v76 = vrot.slane %v44, %v75
    %v77 = vlaneseq
    %v78 = vshrl.u32 %v77, 7
    %v79 = vsub.s32 1, %v78
    %v80 = vrot.slane %v44, %v79
    %v83 = vadd.f32 %v68, %v76
    %v84 = vadd.f32 %v69, %v80
    %v85 = vadd.f32 %v70, %v76
    %v86 = vadd.f32 %v71, %v80
    %v87 = vlaneseq
    %v88 = vand.u32 %v87, 127
    %v89 = vxor.u32 %v83, 2147483648
    %v90 = vxor.u32 %v84, 2147483648
    %v91 = vmul.f32 %v89, 1.442695
    %v92 = vpow.pop %v91
    %v93 = vmul.f32 %v90, 1.442695
    %v94 = vpow.pop %v93
    %v95 = vadd.f32 %v92, 1.0
    %v96 = vadd.f32 %v94, 1.0
    %v97 = vrcp.pop %v95
    %v98 = vmul.f32 1.0, %v97
    %v99 = vrcp.pop %v96
    %v100 = vmul.f32 1.0, %v99
    %v101 = vtanh.pop %v84
    %v102 = vmul.f32 %v98, 0.0
    %104 = vrot.lane.b32.xlu0 %v101, 64
    %v105 = vpop.permute.xlu0 %104
    %v107 = vmul.f32 %v98, %v105
    %109 = vrot.lane.b32.xlu0 %v107, 64
    %v110 = vpop.permute.xlu0 %109
    %v112 = vadd.f32 %v102, %v110
    %v113 = vtanh.pop %v112
    %115 = vrot.lane.b32.xlu0 %v113, 64
    %v116 = vpop.permute.xlu0 %115
    %v118 = vmul.f32 %v100, %v116
    %vm119 = vcmp.lt.s32.totalorder %v88, 32
    %v120 = vsel %vm119, %v118, 0.0
    %122 = vrot.lane.b32.xlu0 %v112, 64
    %v123 = vpop.permute.xlu0 %122
    %v125 = vsel %vm119, %v123, 0.0
    %v128 = vrot.slane %v83, 2
    %v129 = vrot.slane %v84, 2
    %vm132 = vcmask 523264
    %v134 = vsel %vm132, %v120, 0
    %136 = vmatprep.subr.mxu0 %v26
    %137 = vmatpush1.msra.mxu0 %v25
    %138 = vmatprep.subr.mxu0 %v28
    %139 = vmatpush1.msra.mxu0 %v27
    %140 = vmatprep.subr.mxu0 %v30
    %141 = vmatpush1.msra.mxu0 %v29
    %142 = vmatprep.subr.mxu0 %v32
    %143 = vmatpush1.msra.mxu0 %v31
    %144 = vmatprep.subr.mxu0 %v34
    %145 = vmatpush1.msra.mxu0 %v33
    %146 = vmatprep.subr.mxu0 %v36
    %147 = vmatpush1.msra.mxu0 %v35
    %148 = vmatprep.subr.mxu0 %v38
    %149 = vmatpush1.msra.mxu0 %v37
    %150 = vmatprep.subr.mxu0 %v40
    %151 = vmatpush1.msra.mxu0 %v39
    %152 = vmatprep.subr.mxu0 0.0
    %153 = vmatpush1.msra.mxu0 0.0
    %154 = vmatprep.subr.mxu0 0.0
    %155 = vmatpush1.msra.mxu0 0.0
    %156 = vmatprep.subr.mxu0 0.0
    %157 = vmatpush1.msra.mxu0 0.0
    %158 = vmatprep.subr.mxu0 0.0
    %159 = vmatpush1.msra.mxu0 0.0
    %160 = vmatprep.subr.mxu0 0.0
    %161 = vmatpush1.msra.mxu0 0.0
    %162 = vmatprep.subr.mxu0 0.0
    %163 = vmatpush1.msra.mxu0 0.0
    %164 = vmatprep.subr.mxu0 0.0
    %165 = vmatpush1.msra.mxu0 0.0
    %166 = vmatprep.subr.mxu0 0.0
    %167 = vmatpush1.msra.mxu0 0.0
    %168 = vmatprep.subr.mxu0 0.0
    %169 = vmatpush1.msra.mxu0 0.0
    %170 = vmatprep.subr.mxu0 0.0
    %171 = vmatpush1.msra.mxu0 0.0
    %172 = vmatprep.subr.mxu0 0.0
    %173 = vmatpush1.msra.mxu0 0.0
    %174 = vmatprep.subr.mxu0 0.0
    %175 = vmatpush1.msra.mxu0 0.0
    %176 = vmatprep.subr.mxu0 0.0
    %177 = vmatpush1.msra.mxu0 0.0
    %178 = vmatprep.subr.mxu0 0.0
    %179 = vmatpush1.msra.mxu0 0.0
    %180 = vmatprep.subr.mxu0 0.0
    %181 = vmatpush1.msra.mxu0 0.0
    %182 = vmatprep.subr.mxu0 0.0
    %183 = vmatpush1.msra.mxu0 0.0
    %184 = vmatprep.subr.mxu0 0.0
    %185 = vmatpush1.msra.mxu0 0.0
    %186 = vmatprep.subr.mxu0 0.0
    %187 = vmatpush1.msra.mxu0 0.0
    %188 = vmatprep.subr.mxu0 0.0
    %189 = vmatpush1.msra.mxu0 0.0
    %190 = vmatprep.subr.mxu0 0.0
    %191 = vmatpush1.msra.mxu0 0.0
    %192 = vmatprep.subr.mxu0 0.0
    %193 = vmatpush1.msra.mxu0 0.0
    %194 = vmatprep.subr.mxu0 0.0
    %195 = vmatpush1.msra.mxu0 0.0
    %196 = vmatprep.subr.mxu0 0.0
    %197 = vmatpush1.msra.mxu0 0.0
    %198 = vmatprep.subr.mxu0 0.0
    %199 = vmatpush1.msra.mxu0 0.0
    %200 = vmatprep.mubr.f32.mxu0 0.0
    %201 = vmatmul.mubr.f32.gmra.mrb[0].mxu0 %v134
    %v202 = vpop.f32.mrb[0].mxu0
    %v203 = vadd.f32 %v128, %v202
    %v204 = vpop.f32.mrb[0].mxu0
    %v205 = vadd.f32 %v129, %v204
    %206 = vdwg.mxu0
    %v207 = vxor.u32 %v203, 2147483648
    %v208 = vxor.u32 %v205, 2147483648
    %v209 = vmul.f32 %v207, 1.442695
    %v210 = vpow.pop %v209
    %v211 = vmul.f32 %v208, 1.442695
    %v212 = vpow.pop %v211
    %v213 = vadd.f32 %v210, 1.0
    %v214 = vadd.f32 %v212, 1.0
    %v215 = vrcp.pop %v213
    %v216 = vmul.f32 1.0, %v215
    %v217 = vrcp.pop %v214
    %v218 = vmul.f32 1.0, %v217
    %v219 = vtanh.pop %v205
    %221 = vrot.lane.b32.xlu0 %v125, 64
    %v222 = vpop.permute.xlu0 %221
    %v224 = vmul.f32 %v216, %v222
    %226 = vrot.lane.b32.xlu0 %v219, 64
    %v227 = vpop.permute.xlu0 %226
    %v229 = vmul.f32 %v216, %v227
    %231 = vrot.lane.b32.xlu0 %v229, 64
    %v232 = vpop.permute.xlu0 %231
    %v234 = vadd.f32 %v224, %v232
    %v235 = vtanh.pop %v234
    %237 = vrot.lane.b32.xlu0 %v235, 64
    %v238 = vpop.permute.xlu0 %237
    %v240 = vmul.f32 %v218, %v238
    %v241 = vrot.slane %v83, 4
    %v242 = vrot.slane %v84, 4
    %v246 = vsel %vm132, %v240, 0
    %248 = vmatprep.subr.mxu0 %v26
    %249 = vmatpush1.msra.mxu0 %v25
    %250 = vmatprep.subr.mxu0 %v28
    %251 = vmatpush1.msra.mxu0 %v27
    %252 = vmatprep.subr.mxu0 %v30
    %253 = vmatpush1.msra.mxu0 %v29
    %254 = vmatprep.subr.mxu0 %v32
    %255 = vmatpush1.msra.mxu0 %v31
    %256 = vmatprep.subr.mxu0 %v34
    %257 = vmatpush1.msra.mxu0 %v33
    %258 = vmatprep.subr.mxu0 %v36
    %259 = vmatpush1.msra.mxu0 %v35
    %260 = vmatprep.subr.mxu0 %v38
    %261 = vmatpush1.msra.mxu0 %v37
    %262 = vmatprep.subr.mxu0 %v40
    %263 = vmatpush1.msra.mxu0 %v39
    %264 = vmatprep.subr.mxu0 0.0
    %265 = vmatpush1.msra.mxu0 0.0
    %266 = vmatprep.subr.mxu0 0.0
    %267 = vmatpush1.msra.mxu0 0.0
    %268 = vmatprep.subr.mxu0 0.0
    %269 = vmatpush1.msra.mxu0 0.0
    %270 = vmatprep.subr.mxu0 0.0
    %271 = vmatpush1.msra.mxu0 0.0
    %272 = vmatprep.subr.mxu0 0.0
    %273 = vmatpush1.msra.mxu0 0.0
    %274 = vmatprep.subr.mxu0 0.0
    %275 = vmatpush1.msra.mxu0 0.0
    %276 = vmatprep.subr.mxu0 0.0
    %277 = vmatpush1.msra.mxu0 0.0
    %278 = vmatprep.subr.mxu0 0.0
    %279 = vmatpush1.msra.mxu0 0.0
    %280 = vmatprep.subr.mxu0 0.0
    %281 = vmatpush1.msra.mxu0 0.0
    %282 = vmatprep.subr.mxu0 0.0
    %283 = vmatpush1.msra.mxu0 0.0
    %284 = vmatprep.subr.mxu0 0.0
    %285 = vmatpush1.msra.mxu0 0.0
    %286 = vmatprep.subr.mxu0 0.0
    %287 = vmatpush1.msra.mxu0 0.0
    %288 = vmatprep.subr.mxu0 0.0
    %289 = vmatpush1.msra.mxu0 0.0
    %290 = vmatprep.subr.mxu0 0.0
    %291 = vmatpush1.msra.mxu0 0.0
    %292 = vmatprep.subr.mxu0 0.0
    %293 = vmatpush1.msra.mxu0 0.0
    %294 = vmatprep.subr.mxu0 0.0
    %295 = vmatpush1.msra.mxu0 0.0
    %296 = vmatprep.subr.mxu0 0.0
    %297 = vmatpush1.msra.mxu0 0.0
    %298 = vmatprep.subr.mxu0 0.0
    %299 = vmatpush1.msra.mxu0 0.0
    %300 = vmatprep.subr.mxu0 0.0
    %301 = vmatpush1.msra.mxu0 0.0
    %302 = vmatprep.subr.mxu0 0.0
    %303 = vmatpush1.msra.mxu0 0.0
    %304 = vmatprep.subr.mxu0 0.0
    %305 = vmatpush1.msra.mxu0 0.0
    %306 = vmatprep.subr.mxu0 0.0
    %307 = vmatpush1.msra.mxu0 0.0
    %308 = vmatprep.subr.mxu0 0.0
    %309 = vmatpush1.msra.mxu0 0.0
    %310 = vmatprep.subr.mxu0 0.0
    %311 = vmatpush1.msra.mxu0 0.0
    %312 = vmatprep.mubr.f32.mxu0 0.0
    %313 = vmatmul.mubr.f32.gmra.mrb[0].mxu0 %v246
    %v314 = vpop.f32.mrb[0].mxu0
    %v315 = vadd.f32 %v241, %v314
    %v316 = vpop.f32.mrb[0].mxu0
    %v317 = vadd.f32 %v242, %v316
    %318 = vdwg.mxu0
    %v319 = vxor.u32 %v315, 2147483648
    %v320 = vxor.u32 %v317, 2147483648
    %v321 = vmul.f32 %v319, 1.442695
    %v322 = vpow.pop %v321
    %v323 = vmul.f32 %v320, 1.442695
    %v324 = vpow.pop %v323
    %v325 = vadd.f32 %v322, 1.0
    %v326 = vadd.f32 %v324, 1.0
    %v327 = vrcp.pop %v325
    %v328 = vmul.f32 1.0, %v327
    %v329 = vrcp.pop %v326
    %v330 = vmul.f32 1.0, %v329
    %v331 = vtanh.pop %v317
    %v332 = vmul.f32 %v328, %v234
    %334 = vrot.lane.b32.xlu0 %v331, 64
    %v335 = vpop.permute.xlu0 %334
    %v337 = vmul.f32 %v328, %v335
    %339 = vrot.lane.b32.xlu0 %v337, 64
    %v340 = vpop.permute.xlu0 %339
    %v342 = vadd.f32 %v332, %v340
    %v343 = vtanh.pop %v342
    %345 = vrot.lane.b32.xlu0 %v343, 64
    %v346 = vpop.permute.xlu0 %345
    %v348 = vmul.f32 %v330, %v346
    %v349 = vrot.slane %v83, 6
    %v350 = vrot.slane %v84, 6
    %v354 = vsel %vm132, %v348, 0
    %356 = vmatprep.subr.mxu0 %v26
    %357 = vmatpush1.msra.mxu0 %v25
    %358 = vmatprep.subr.mxu0 %v28
    %359 = vmatpush1.msra.mxu0 %v27
    %360 = vmatprep.subr.mxu0 %v30
    %361 = vmatpush1.msra.mxu0 %v29
    %362 = vmatprep.subr.mxu0 %v32
    %363 = vmatpush1.msra.mxu0 %v31
    %364 = vmatprep.subr.mxu0 %v34
    %365 = vmatpush1.msra.mxu0 %v33
    %366 = vmatprep.subr.mxu0 %v36
    %367 = vmatpush1.msra.mxu0 %v35
    %368 = vmatprep.subr.mxu0 %v38
    %369 = vmatpush1.msra.mxu0 %v37
    %370 = vmatprep.subr.mxu0 %v40
    %371 = vmatpush1.msra.mxu0 %v39
    %372 = vmatprep.subr.mxu0 0.0
    %373 = vmatpush1.msra.mxu0 0.0
    %374 = vmatprep.subr.mxu0 0.0
    %375 = vmatpush1.msra.mxu0 0.0
    %376 = vmatprep.subr.mxu0 0.0
    %377 = vmatpush1.msra.mxu0 0.0
    %378 = vmatprep.subr.mxu0 0.0
    %379 = vmatpush1.msra.mxu0 0.0
    %380 = vmatprep.subr.mxu0 0.0
    %381 = vmatpush1.msra.mxu0 0.0
    %382 = vmatprep.subr.mxu0 0.0
    %383 = vmatpush1.msra.mxu0 0.0
    %384 = vmatprep.subr.mxu0 0.0
    %385 = vmatpush1.msra.mxu0 0.0
    %386 = vmatprep.subr.mxu0 0.0
    %387 = vmatpush1.msra.mxu0 0.0
    %388 = vmatprep.subr.mxu0 0.0
    %389 = vmatpush1.msra.mxu0 0.0
    %390 = vmatprep.subr.mxu0 0.0
    %391 = vmatpush1.msra.mxu0 0.0
    %392 = vmatprep.subr.mxu0 0.0
    %393 = vmatpush1.msra.mxu0 0.0
    %394 = vmatprep.subr.mxu0 0.0
    %395 = vmatpush1.msra.mxu0 0.0
    %396 = vmatprep.subr.mxu0 0.0
    %397 = vmatpush1.msra.mxu0 0.0
    %398 = vmatprep.subr.mxu0 0.0
    %399 = vmatpush1.msra.mxu0 0.0
    %400 = vmatprep.subr.mxu0 0.0
    %401 = vmatpush1.msra.mxu0 0.0
    %402 = vmatprep.subr.mxu0 0.0
    %403 = vmatpush1.msra.mxu0 0.0
    %404 = vmatprep.subr.mxu0 0.0
    %405 = vmatpush1.msra.mxu0 0.0
    %406 = vmatprep.subr.mxu0 0.0
    %407 = vmatpush1.msra.mxu0 0.0
    %408 = vmatprep.subr.mxu0 0.0
    %409 = vmatpush1.msra.mxu0 0.0
    %410 = vmatprep.subr.mxu0 0.0
    %411 = vmatpush1.msra.mxu0 0.0
    %412 = vmatprep.subr.mxu0 0.0
    %413 = vmatpush1.msra.mxu0 0.0
    %414 = vmatprep.subr.mxu0 0.0
    %415 = vmatpush1.msra.mxu0 0.0
    %416 = vmatprep.subr.mxu0 0.0
    %417 = vmatpush1.msra.mxu0 0.0
    %418 = vmatprep.subr.mxu0 0.0
    %419 = vmatpush1.msra.mxu0 0.0
    %420 = vmatprep.mubr.f32.mxu0 0.0
    %421 = vmatmul.mubr.f32.gmra.mrb[0].mxu0 %v354
    %v422 = vpop.f32.mrb[0].mxu0
    %v423 = vadd.f32 %v349, %v422
    %v424 = vpop.f32.mrb[0].mxu0
    %v425 = vadd.f32 %v350, %v424
    %426 = vdwg.mxu0
    %v427 = vxor.u32 %v423, 2147483648
    %v428 = vxor.u32 %v425, 2147483648
    %v429 = vmul.f32 %v427, 1.442695
    %v430 = vpow.pop %v429
    %v431 = vmul.f32 %v428, 1.442695
    %v432 = vpow.pop %v431
    %v433 = vadd.f32 %v430, 1.0
    %v434 = vadd.f32 %v432, 1.0
    %v435 = vrcp.pop %v433
    %v436 = vmul.f32 1.0, %v435
    %v437 = vrcp.pop %v434
    %v438 = vmul.f32 1.0, %v437
    %v439 = vtanh.pop %v425
    %v440 = vmul.f32 %v436, %v342
    %442 = vrot.lane.b32.xlu0 %v439, 64
    %v443 = vpop.permute.xlu0 %442
    %v445 = vmul.f32 %v436, %v443
    %447 = vrot.lane.b32.xlu0 %v445, 64
    %v448 = vpop.permute.xlu0 %447
    %v450 = vadd.f32 %v440, %v448
    %v451 = vtanh.pop %v450
    %453 = vrot.lane.b32.xlu0 %v451, 64
    %v454 = vpop.permute.xlu0 %453
    %v456 = vmul.f32 %v438, %v454
    %v458 = vsel %vm132, %v456, 0
    %460 = vmatprep.subr.mxu0 %v26
    %461 = vmatpush1.msra.mxu0 %v25
    %462 = vmatprep.subr.mxu0 %v28
    %463 = vmatpush1.msra.mxu0 %v27
    %464 = vmatprep.subr.mxu0 %v30
    %465 = vmatpush1.msra.mxu0 %v29
    %466 = vmatprep.subr.mxu0 %v32
    %467 = vmatpush1.msra.mxu0 %v31
    %468 = vmatprep.subr.mxu0 %v34
    %469 = vmatpush1.msra.mxu0 %v33
    %470 = vmatprep.subr.mxu0 %v36
    %471 = vmatpush1.msra.mxu0 %v35
    %472 = vmatprep.subr.mxu0 %v38
    %473 = vmatpush1.msra.mxu0 %v37
    %474 = vmatprep.subr.mxu0 %v40
    %475 = vmatpush1.msra.mxu0 %v39
    %476 = vmatprep.subr.mxu0 0.0
    %477 = vmatpush1.msra.mxu0 0.0
    %478 = vmatprep.subr.mxu0 0.0
    %479 = vmatpush1.msra.mxu0 0.0
    %480 = vmatprep.subr.mxu0 0.0
    %481 = vmatpush1.msra.mxu0 0.0
    %482 = vmatprep.subr.mxu0 0.0
    %483 = vmatpush1.msra.mxu0 0.0
    %484 = vmatprep.subr.mxu0 0.0
    %485 = vmatpush1.msra.mxu0 0.0
    %486 = vmatprep.subr.mxu0 0.0
    %487 = vmatpush1.msra.mxu0 0.0
    %488 = vmatprep.subr.mxu0 0.0
    %489 = vmatpush1.msra.mxu0 0.0
    %490 = vmatprep.subr.mxu0 0.0
    %491 = vmatpush1.msra.mxu0 0.0
    %492 = vmatprep.subr.mxu0 0.0
    %493 = vmatpush1.msra.mxu0 0.0
    %494 = vmatprep.subr.mxu0 0.0
    %495 = vmatpush1.msra.mxu0 0.0
    %496 = vmatprep.subr.mxu0 0.0
    %497 = vmatpush1.msra.mxu0 0.0
    %498 = vmatprep.subr.mxu0 0.0
    %499 = vmatpush1.msra.mxu0 0.0
    %500 = vmatprep.subr.mxu0 0.0
    %501 = vmatpush1.msra.mxu0 0.0
    %502 = vmatprep.subr.mxu0 0.0
    %503 = vmatpush1.msra.mxu0 0.0
    %504 = vmatprep.subr.mxu0 0.0
    %505 = vmatpush1.msra.mxu0 0.0
    %506 = vmatprep.subr.mxu0 0.0
    %507 = vmatpush1.msra.mxu0 0.0
    %508 = vmatprep.subr.mxu0 0.0
    %509 = vmatpush1.msra.mxu0 0.0
    %510 = vmatprep.subr.mxu0 0.0
    %511 = vmatpush1.msra.mxu0 0.0
    %512 = vmatprep.subr.mxu0 0.0
    %513 = vmatpush1.msra.mxu0 0.0
    %514 = vmatprep.subr.mxu0 0.0
    %515 = vmatpush1.msra.mxu0 0.0
    %516 = vmatprep.subr.mxu0 0.0
    %517 = vmatpush1.msra.mxu0 0.0
    %518 = vmatprep.subr.mxu0 0.0
    %519 = vmatpush1.msra.mxu0 0.0
    %520 = vmatprep.subr.mxu0 0.0
    %521 = vmatpush1.msra.mxu0 0.0
    %522 = vmatprep.subr.mxu0 0.0
    %523 = vmatpush1.msra.mxu0 0.0
    %524 = vmatprep.mubr.f32.mxu0 0.0
    %525 = vmatmul.mubr.f32.gmra.mrb[0].mxu0 %v458
    %v526 = vpop.f32.mrb[0].mxu0
    %v527 = vadd.f32 %v85, %v526
    %v528 = vpop.f32.mrb[0].mxu0
    %v529 = vadd.f32 %v86, %v528
    %530 = vdwg.mxu0
    %v531 = vxor.u32 %v527, 2147483648
    %v532 = vxor.u32 %v529, 2147483648
    %v533 = vmul.f32 %v531, 1.442695
    %v534 = vpow.pop %v533
    %v535 = vmul.f32 %v532, 1.442695
    %v536 = vpow.pop %v535
    %v537 = vadd.f32 %v534, 1.0
    %v538 = vadd.f32 %v536, 1.0
    %v539 = vrcp.pop %v537
    %v540 = vmul.f32 1.0, %v539
    %v541 = vrcp.pop %v538
    %v542 = vmul.f32 1.0, %v541
    %v543 = vtanh.pop %v529
    %v544 = vmul.f32 %v540, %v450
    %546 = vrot.lane.b32.xlu0 %v543, 64
    %v547 = vpop.permute.xlu0 %546
    %v549 = vmul.f32 %v540, %v547
    %551 = vrot.lane.b32.xlu0 %v549, 64
    %v552 = vpop.permute.xlu0 %551
    %v554 = vadd.f32 %v544, %v552
    %v555 = vtanh.pop %v554
    %557 = vrot.lane.b32.xlu0 %v555, 64
    %v558 = vpop.permute.xlu0 %557
    %v560 = vmul.f32 %v542, %v558
    %v563 = vrot.slane %v85, 2
    %v564 = vrot.slane %v86, 2
    %v568 = vsel %vm132, %v560, 0
    %570 = vmatprep.subr.mxu0 %v26
    %571 = vmatpush1.msra.mxu0 %v25
    %572 = vmatprep.subr.mxu0 %v28
    %573 = vmatpush1.msra.mxu0 %v27
    %574 = vmatprep.subr.mxu0 %v30
    %575 = vmatpush1.msra.mxu0 %v29
    %576 = vmatprep.subr.mxu0 %v32
    %577 = vmatpush1.msra.mxu0 %v31
    %578 = vmatprep.subr.mxu0 %v34
    %579 = vmatpush1.msra.mxu0 %v33
    %580 = vmatprep.subr.mxu0 %v36
    %581 = vmatpush1.msra.mxu0 %v35
    %582 = vmatprep.subr.mxu0 %v38
    %583 = vmatpush1.msra.mxu0 %v37
    %584 = vmatprep.subr.mxu0 %v40
    %585 = vmatpush1.msra.mxu0 %v39
    %586 = vmatprep.subr.mxu0 0.0
    %587 = vmatpush1.msra.mxu0 0.0
    %588 = vmatprep.subr.mxu0 0.0
    %589 = vmatpush1.msra.mxu0 0.0
    %590 = vmatprep.subr.mxu0 0.0
    %591 = vmatpush1.msra.mxu0 0.0
    %592 = vmatprep.subr.mxu0 0.0
    %593 = vmatpush1.msra.mxu0 0.0
    %594 = vmatprep.subr.mxu0 0.0
    %595 = vmatpush1.msra.mxu0 0.0
    %596 = vmatprep.subr.mxu0 0.0
    %597 = vmatpush1.msra.mxu0 0.0
    %598 = vmatprep.subr.mxu0 0.0
    %599 = vmatpush1.msra.mxu0 0.0
    %600 = vmatprep.subr.mxu0 0.0
    %601 = vmatpush1.msra.mxu0 0.0
    %602 = vmatprep.subr.mxu0 0.0
    %603 = vmatpush1.msra.mxu0 0.0
    %604 = vmatprep.subr.mxu0 0.0
    %605 = vmatpush1.msra.mxu0 0.0
    %606 = vmatprep.subr.mxu0 0.0
    %607 = vmatpush1.msra.mxu0 0.0
    %608 = vmatprep.subr.mxu0 0.0
    %609 = vmatpush1.msra.mxu0 0.0
    %610 = vmatprep.subr.mxu0 0.0
    %611 = vmatpush1.msra.mxu0 0.0
    %612 = vmatprep.subr.mxu0 0.0
    %613 = vmatpush1.msra.mxu0 0.0
    %614 = vmatprep.subr.mxu0 0.0
    %615 = vmatpush1.msra.mxu0 0.0
    %616 = vmatprep.subr.mxu0 0.0
    %617 = vmatpush1.msra.mxu0 0.0
    %618 = vmatprep.subr.mxu0 0.0
    %619 = vmatpush1.msra.mxu0 0.0
    %620 = vmatprep.subr.mxu0 0.0
    %621 = vmatpush1.msra.mxu0 0.0
    %622 = vmatprep.subr.mxu0 0.0
    %623 = vmatpush1.msra.mxu0 0.0
    %624 = vmatprep.subr.mxu0 0.0
    %625 = vmatpush1.msra.mxu0 0.0
    %626 = vmatprep.subr.mxu0 0.0
    %627 = vmatpush1.msra.mxu0 0.0
    %628 = vmatprep.subr.mxu0 0.0
    %629 = vmatpush1.msra.mxu0 0.0
    %630 = vmatprep.subr.mxu0 0.0
    %631 = vmatpush1.msra.mxu0 0.0
    %632 = vmatprep.subr.mxu0 0.0
    %633 = vmatpush1.msra.mxu0 0.0
    %634 = vmatprep.mubr.f32.mxu0 0.0
    %635 = vmatmul.mubr.f32.gmra.mrb[0].mxu0 %v568
    %v636 = vpop.f32.mrb[0].mxu0
    %v637 = vadd.f32 %v563, %v636
    %v638 = vpop.f32.mrb[0].mxu0
    %v639 = vadd.f32 %v564, %v638
    %640 = vdwg.mxu0
    %v641 = vxor.u32 %v637, 2147483648
    %v642 = vxor.u32 %v639, 2147483648
    %v643 = vmul.f32 %v641, 1.442695
    %v644 = vpow.pop %v643
    %v645 = vmul.f32 %v642, 1.442695
    %v646 = vpow.pop %v645
    %v647 = vadd.f32 %v644, 1.0
    %v648 = vadd.f32 %v646, 1.0
    %v649 = vrcp.pop %v647
    %v650 = vmul.f32 1.0, %v649
    %v651 = vrcp.pop %v648
    %v652 = vmul.f32 1.0, %v651
    %v653 = vtanh.pop %v639
    %v654 = vmul.f32 %v650, %v554
    %656 = vrot.lane.b32.xlu0 %v653, 64
    %v657 = vpop.permute.xlu0 %656
    %v659 = vmul.f32 %v650, %v657
    %661 = vrot.lane.b32.xlu0 %v659, 64
    %v662 = vpop.permute.xlu0 %661
    %v664 = vadd.f32 %v654, %v662
    %v665 = vtanh.pop %v664
    %667 = vrot.lane.b32.xlu0 %v665, 64
    %v668 = vpop.permute.xlu0 %667
    %v670 = vmul.f32 %v652, %v668
    %v671 = vrot.slane %v85, 4
    %v672 = vrot.slane %v86, 4
    %v676 = vsel %vm132, %v670, 0
    %678 = vmatprep.subr.mxu0 %v26
    %679 = vmatpush1.msra.mxu0 %v25
    %680 = vmatprep.subr.mxu0 %v28
    %681 = vmatpush1.msra.mxu0 %v27
    %682 = vmatprep.subr.mxu0 %v30
    %683 = vmatpush1.msra.mxu0 %v29
    %684 = vmatprep.subr.mxu0 %v32
    %685 = vmatpush1.msra.mxu0 %v31
    %686 = vmatprep.subr.mxu0 %v34
    %687 = vmatpush1.msra.mxu0 %v33
    %688 = vmatprep.subr.mxu0 %v36
    %689 = vmatpush1.msra.mxu0 %v35
    %690 = vmatprep.subr.mxu0 %v38
    %691 = vmatpush1.msra.mxu0 %v37
    %692 = vmatprep.subr.mxu0 %v40
    %693 = vmatpush1.msra.mxu0 %v39
    %694 = vmatprep.subr.mxu0 0.0
    %695 = vmatpush1.msra.mxu0 0.0
    %696 = vmatprep.subr.mxu0 0.0
    %697 = vmatpush1.msra.mxu0 0.0
    %698 = vmatprep.subr.mxu0 0.0
    %699 = vmatpush1.msra.mxu0 0.0
    %700 = vmatprep.subr.mxu0 0.0
    %701 = vmatpush1.msra.mxu0 0.0
    %702 = vmatprep.subr.mxu0 0.0
    %703 = vmatpush1.msra.mxu0 0.0
    %704 = vmatprep.subr.mxu0 0.0
    %705 = vmatpush1.msra.mxu0 0.0
    %706 = vmatprep.subr.mxu0 0.0
    %707 = vmatpush1.msra.mxu0 0.0
    %708 = vmatprep.subr.mxu0 0.0
    %709 = vmatpush1.msra.mxu0 0.0
    %710 = vmatprep.subr.mxu0 0.0
    %711 = vmatpush1.msra.mxu0 0.0
    %712 = vmatprep.subr.mxu0 0.0
    %713 = vmatpush1.msra.mxu0 0.0
    %714 = vmatprep.subr.mxu0 0.0
    %715 = vmatpush1.msra.mxu0 0.0
    %716 = vmatprep.subr.mxu0 0.0
    %717 = vmatpush1.msra.mxu0 0.0
    %718 = vmatprep.subr.mxu0 0.0
    %719 = vmatpush1.msra.mxu0 0.0
    %720 = vmatprep.subr.mxu0 0.0
    %721 = vmatpush1.msra.mxu0 0.0
    %722 = vmatprep.subr.mxu0 0.0
    %723 = vmatpush1.msra.mxu0 0.0
    %724 = vmatprep.subr.mxu0 0.0
    %725 = vmatpush1.msra.mxu0 0.0
    %726 = vmatprep.subr.mxu0 0.0
    %727 = vmatpush1.msra.mxu0 0.0
    %728 = vmatprep.subr.mxu0 0.0
    %729 = vmatpush1.msra.mxu0 0.0
    %730 = vmatprep.subr.mxu0 0.0
    %731 = vmatpush1.msra.mxu0 0.0
    %732 = vmatprep.subr.mxu0 0.0
    %733 = vmatpush1.msra.mxu0 0.0
    %734 = vmatprep.subr.mxu0 0.0
    %735 = vmatpush1.msra.mxu0 0.0
    %736 = vmatprep.subr.mxu0 0.0
    %737 = vmatpush1.msra.mxu0 0.0
    %738 = vmatprep.subr.mxu0 0.0
    %739 = vmatpush1.msra.mxu0 0.0
    %740 = vmatprep.subr.mxu0 0.0
    %741 = vmatpush1.msra.mxu0 0.0
    %742 = vmatprep.mubr.f32.mxu0 0.0
    %743 = vmatmul.mubr.f32.gmra.mrb[0].mxu0 %v676
    %v744 = vpop.f32.mrb[0].mxu0
    %v745 = vadd.f32 %v671, %v744
    %v746 = vpop.f32.mrb[0].mxu0
    %v747 = vadd.f32 %v672, %v746
    %748 = vdwg.mxu0
    %v749 = vxor.u32 %v745, 2147483648
    %v750 = vxor.u32 %v747, 2147483648
    %v751 = vmul.f32 %v749, 1.442695
    %v752 = vpow.pop %v751
    %v753 = vmul.f32 %v750, 1.442695
    %v754 = vpow.pop %v753
    %v755 = vadd.f32 %v752, 1.0
    %v756 = vadd.f32 %v754, 1.0
    %v757 = vrcp.pop %v755
    %v758 = vmul.f32 1.0, %v757
    %v759 = vrcp.pop %v756
    %v760 = vmul.f32 1.0, %v759
    %v761 = vtanh.pop %v747
    %v762 = vmul.f32 %v758, %v664
    %764 = vrot.lane.b32.xlu0 %v761, 64
    %v765 = vpop.permute.xlu0 %764
    %v767 = vmul.f32 %v758, %v765
    %769 = vrot.lane.b32.xlu0 %v767, 64
    %v770 = vpop.permute.xlu0 %769
    %v772 = vadd.f32 %v762, %v770
    %v773 = vtanh.pop %v772
    %775 = vrot.lane.b32.xlu0 %v773, 64
    %v776 = vpop.permute.xlu0 %775
    %v778 = vmul.f32 %v760, %v776
    %v779 = vrot.slane %v85, 6
    %v780 = vrot.slane %v86, 6
    %v784 = vsel %vm132, %v778, 0
    %786 = vmatprep.subr.mxu0 %v26
    %787 = vmatpush1.msra.mxu0 %v25
    %788 = vmatprep.subr.mxu0 %v28
    %789 = vmatpush1.msra.mxu0 %v27
    %790 = vmatprep.subr.mxu0 %v30
    %791 = vmatpush1.msra.mxu0 %v29
    %792 = vmatprep.subr.mxu0 %v32
    %793 = vmatpush1.msra.mxu0 %v31
    %794 = vmatprep.subr.mxu0 %v34
    %795 = vmatpush1.msra.mxu0 %v33
    %796 = vmatprep.subr.mxu0 %v36
    %797 = vmatpush1.msra.mxu0 %v35
    %798 = vmatprep.subr.mxu0 %v38
    %799 = vmatpush1.msra.mxu0 %v37
    %800 = vmatprep.subr.mxu0 %v40
    %801 = vmatpush1.msra.mxu0 %v39
    %802 = vmatprep.subr.mxu0 0.0
    %803 = vmatpush1.msra.mxu0 0.0
    %804 = vmatprep.subr.mxu0 0.0
    %805 = vmatpush1.msra.mxu0 0.0
    %806 = vmatprep.subr.mxu0 0.0
    %807 = vmatpush1.msra.mxu0 0.0
    %808 = vmatprep.subr.mxu0 0.0
    %809 = vmatpush1.msra.mxu0 0.0
    %810 = vmatprep.subr.mxu0 0.0
    %811 = vmatpush1.msra.mxu0 0.0
    %812 = vmatprep.subr.mxu0 0.0
    %813 = vmatpush1.msra.mxu0 0.0
    %814 = vmatprep.subr.mxu0 0.0
    %815 = vmatpush1.msra.mxu0 0.0
    %816 = vmatprep.subr.mxu0 0.0
    %817 = vmatpush1.msra.mxu0 0.0
    %818 = vmatprep.subr.mxu0 0.0
    %819 = vmatpush1.msra.mxu0 0.0
    %820 = vmatprep.subr.mxu0 0.0
    %821 = vmatpush1.msra.mxu0 0.0
    %822 = vmatprep.subr.mxu0 0.0
    %823 = vmatpush1.msra.mxu0 0.0
    %824 = vmatprep.subr.mxu0 0.0
    %825 = vmatpush1.msra.mxu0 0.0
    %826 = vmatprep.subr.mxu0 0.0
    %827 = vmatpush1.msra.mxu0 0.0
    %828 = vmatprep.subr.mxu0 0.0
    %829 = vmatpush1.msra.mxu0 0.0
    %830 = vmatprep.subr.mxu0 0.0
    %831 = vmatpush1.msra.mxu0 0.0
    %832 = vmatprep.subr.mxu0 0.0
    %833 = vmatpush1.msra.mxu0 0.0
    %834 = vmatprep.subr.mxu0 0.0
    %835 = vmatpush1.msra.mxu0 0.0
    %836 = vmatprep.subr.mxu0 0.0
    %837 = vmatpush1.msra.mxu0 0.0
    %838 = vmatprep.subr.mxu0 0.0
    %839 = vmatpush1.msra.mxu0 0.0
    %840 = vmatprep.subr.mxu0 0.0
    %841 = vmatpush1.msra.mxu0 0.0
    %842 = vmatprep.subr.mxu0 0.0
    %843 = vmatpush1.msra.mxu0 0.0
    %844 = vmatprep.subr.mxu0 0.0
    %845 = vmatpush1.msra.mxu0 0.0
    %846 = vmatprep.subr.mxu0 0.0
    %847 = vmatpush1.msra.mxu0 0.0
    %848 = vmatprep.subr.mxu0 0.0
    %849 = vmatpush1.msra.mxu0 0.0
    %850 = vmatprep.mubr.f32.mxu0 0.0
    %851 = vmatmul.mubr.f32.gmra.mrb[0].mxu0 %v784
    %v852 = vpop.f32.mrb[0].mxu0
    %v853 = vadd.f32 %v779, %v852
    %v854 = vpop.f32.mrb[0].mxu0
    %v855 = vadd.f32 %v780, %v854
    %856 = vdwg.mxu0
    %v857 = vxor.u32 %v853, 2147483648
    %v858 = vxor.u32 %v855, 2147483648
    %v859 = vmul.f32 %v857, 1.442695
    %v860 = vpow.pop %v859
    %v861 = vmul.f32 %v858, 1.442695
    %v862 = vpow.pop %v861
    %v863 = vadd.f32 %v860, 1.0
    %v864 = vadd.f32 %v862, 1.0
    %v865 = vrcp.pop %v863
    %v866 = vmul.f32 1.0, %v865
    %v867 = vrcp.pop %v864
    %v868 = vmul.f32 1.0, %v867
    %v869 = vtanh.pop %v855
    %v870 = vmul.f32 %v866, %v772
    %872 = vrot.lane.b32.xlu0 %v869, 64
    %v873 = vpop.permute.xlu0 %872
    %v875 = vmul.f32 %v866, %v873
    %877 = vrot.lane.b32.xlu0 %v875, 64
    %v878 = vpop.permute.xlu0 %877
    %v880 = vadd.f32 %v870, %v878
    %v881 = vtanh.pop %v880
    %883 = vrot.lane.b32.xlu0 %v881, 64
    %v884 = vpop.permute.xlu0 %883
    %v886 = vmul.f32 %v868, %v884
    %v888 = vsel %vm132, %v886, 0
    %890 = vmatprep.subr.mxu0 %v26
    %891 = vmatpush1.msra.mxu0 %v25
    %892 = vmatprep.subr.mxu0 %v28
    %893 = vmatpush1.msra.mxu0 %v27
    %894 = vmatprep.subr.mxu0 %v30
    %895 = vmatpush1.msra.mxu0 %v29
    %896 = vmatprep.subr.mxu0 %v32
    %897 = vmatpush1.msra.mxu0 %v31
    %898 = vmatprep.subr.mxu0 %v34
    %899 = vmatpush1.msra.mxu0 %v33
    %900 = vmatprep.subr.mxu0 %v36
    %901 = vmatpush1.msra.mxu0 %v35
    %902 = vmatprep.subr.mxu0 %v38
    %903 = vmatpush1.msra.mxu0 %v37
    %904 = vmatprep.subr.mxu0 %v40
    %905 = vmatpush1.msra.mxu0 %v39
    %906 = vmatprep.subr.mxu0 0.0
    %907 = vmatpush1.msra.mxu0 0.0
    %908 = vmatprep.subr.mxu0 0.0
    %909 = vmatpush1.msra.mxu0 0.0
    %910 = vmatprep.subr.mxu0 0.0
    %911 = vmatpush1.msra.mxu0 0.0
    %912 = vmatprep.subr.mxu0 0.0
    %913 = vmatpush1.msra.mxu0 0.0
    %914 = vmatprep.subr.mxu0 0.0
    %915 = vmatpush1.msra.mxu0 0.0
    %916 = vmatprep.subr.mxu0 0.0
    %917 = vmatpush1.msra.mxu0 0.0
    %918 = vmatprep.subr.mxu0 0.0
    %919 = vmatpush1.msra.mxu0 0.0
    %920 = vmatprep.subr.mxu0 0.0
    %921 = vmatpush1.msra.mxu0 0.0
    %922 = vmatprep.subr.mxu0 0.0
    %923 = vmatpush1.msra.mxu0 0.0
    %924 = vmatprep.subr.mxu0 0.0
    %925 = vmatpush1.msra.mxu0 0.0
    %926 = vmatprep.subr.mxu0 0.0
    %927 = vmatpush1.msra.mxu0 0.0
    %928 = vmatprep.subr.mxu0 0.0
    %929 = vmatpush1.msra.mxu0 0.0
    %930 = vmatprep.subr.mxu0 0.0
    %931 = vmatpush1.msra.mxu0 0.0
    %932 = vmatprep.subr.mxu0 0.0
    %933 = vmatpush1.msra.mxu0 0.0
    %934 = vmatprep.subr.mxu0 0.0
    %935 = vmatpush1.msra.mxu0 0.0
    %936 = vmatprep.subr.mxu0 0.0
    %937 = vmatpush1.msra.mxu0 0.0
    %938 = vmatprep.subr.mxu0 0.0
    %939 = vmatpush1.msra.mxu0 0.0
    %940 = vmatprep.subr.mxu0 0.0
    %941 = vmatpush1.msra.mxu0 0.0
    %942 = vmatprep.subr.mxu0 0.0
    %943 = vmatpush1.msra.mxu0 0.0
    %944 = vmatprep.subr.mxu0 0.0
    %945 = vmatpush1.msra.mxu0 0.0
    %946 = vmatprep.subr.mxu0 0.0
    %947 = vmatpush1.msra.mxu0 0.0
    %948 = vmatprep.subr.mxu0 0.0
    %949 = vmatpush1.msra.mxu0 0.0
    %950 = vmatprep.subr.mxu0 0.0
    %951 = vmatpush1.msra.mxu0 0.0
    %952 = vmatprep.subr.mxu0 0.0
    %953 = vmatpush1.msra.mxu0 0.0
    %954 = vmatprep.mubr.f32.mxu0 0.0
    %955 = vmatmul.mubr.f32.gmra.mrb[0].mxu0 %v888
    %v956 = vpop.f32.mrb[0].mxu0
    %v957 = vadd.f32 %v76, %v956
    %v958 = vpop.f32.mrb[0].mxu0
    %v959 = vadd.f32 %v80, %v958
    %960 = vdwg.mxu0
    %v961 = vxor.u32 %v957, 2147483648
    %v962 = vxor.u32 %v959, 2147483648
    %v963 = vmul.f32 %v961, 1.442695
    %v964 = vpow.pop %v963
    %v965 = vmul.f32 %v962, 1.442695
    %v966 = vpow.pop %v965
    %v967 = vadd.f32 %v964, 1.0
    %v968 = vadd.f32 %v966, 1.0
    %v969 = vrcp.pop %v967
    %v970 = vmul.f32 1.0, %v969
    %v971 = vrcp.pop %v968
    %v972 = vmul.f32 1.0, %v971
    %v973 = vtanh.pop %v959
    %v974 = vmul.f32 %v970, %v880
    %976 = vrot.lane.b32.xlu0 %v973, 64
    %v977 = vpop.permute.xlu0 %976
    %v979 = vmul.f32 %v970, %v977
    %981 = vrot.lane.b32.xlu0 %v979, 64
    %v982 = vpop.permute.xlu0 %981
    %v984 = vadd.f32 %v974, %v982
    %v985 = vtanh.pop %v984
    %987 = vrot.lane.b32.xlu0 %v985, 64
    %v988 = vpop.permute.xlu0 %987
    %v990 = vmul.f32 %v972, %v988
    %v991 = vld [vmem:[#allocation2 + $0xa0] sm:$0xff]
    %v992 = vld [vmem:[#allocation2 + $0xb0] sm:$0xff]
    %v993 = vld [vmem:[#allocation2 + $0xc0] sm:$0xff]
    %v994 = vld [vmem:[#allocation2 + $0xd0] sm:$0xff]
    %v995 = vld [vmem:[#allocation2 + $0xe0] sm:$0xff]
    %v996 = vld [vmem:[#allocation2 + $0xf0] sm:$0xff]
    %v997 = vld [vmem:[#allocation2 + $0x100] sm:$0xff]
    %v998 = vld [vmem:[#allocation2 + $0x110] sm:$0xff]
    %v999 = vld [vmem:[#allocation2 + $0x120] sm:$0xff]
    %v1000 = vld [vmem:[#allocation2 + $0x130] sm:$0xff]
    %v1001 = vld [vmem:[#allocation2 + $0x140] sm:$0xff]
    %v1002 = vld [vmem:[#allocation2 + $0x150] sm:$0xff]
    %v1003 = vld [vmem:[#allocation2 + $0x160] sm:$0xff]
    %v1004 = vld [vmem:[#allocation2 + $0x170] sm:$0xff]
    %v1005 = vld [vmem:[#allocation2 + $0x180] sm:$0xff]
    %v1006 = vld [vmem:[#allocation2 + $0x190] sm:$0xff]
    %s1007 = scalar_lea.vmem [#allocation2], 416
    %v1008 = vld [vmem:[%s1007] ss:$8 sm:$0x3]
    %v1010 = vlaneseq
    %v1011 = vshrl.u32 %v1010, 7
    %v1012 = vsub.s32 0, %v1011
    %v1013 = vrot.slane %v1008, %v1012
    %1016 = vrot.lane.b32.xlu0 %v990, 96
    %v1017 = vpop.permute.xlu0 %1016
    %vm1018 = vcmask 261120
    %v1019 = vsel %vm1018, %v1017, 0
    %1021 = vmatprep.subr.mxu0 0.0
    %1022 = vmatpush1.msra.mxu0 %v991
    %1023 = vmatprep.subr.mxu0 0.0
    %1024 = vmatpush1.msra.mxu0 %v992
    %1025 = vmatprep.subr.mxu0 0.0
    %1026 = vmatpush1.msra.mxu0 %v993
    %1027 = vmatprep.subr.mxu0 0.0
    %1028 = vmatpush1.msra.mxu0 %v994
    %1029 = vmatprep.subr.mxu0 0.0
    %1030 = vmatpush1.msra.mxu0 0.0
    %1031 = vmatprep.subr.mxu0 0.0
    %1032 = vmatpush1.msra.mxu0 0.0
    %1033 = vmatprep.subr.mxu0 0.0
    %1034 = vmatpush1.msra.mxu0 0.0
    %1035 = vmatprep.subr.mxu0 0.0
    %1036 = vmatpush1.msra.mxu0 0.0
    %1037 = vmatprep.subr.mxu0 0.0
    %1038 = vmatpush1.msra.mxu0 0.0
    %1039 = vmatprep.subr.mxu0 0.0
    %1040 = vmatpush1.msra.mxu0 0.0
    %1041 = vmatprep.subr.mxu0 0.0
    %1042 = vmatpush1.msra.mxu0 0.0
    %1043 = vmatprep.subr.mxu0 0.0
    %1044 = vmatpush1.msra.mxu0 0.0
    %1045 = vmatprep.subr.mxu0 0.0
    %1046 = vmatpush1.msra.mxu0 0.0
    %1047 = vmatprep.subr.mxu0 0.0
    %1048 = vmatpush1.msra.mxu0 0.0
    %1049 = vmatprep.subr.mxu0 0.0
    %1050 = vmatpush1.msra.mxu0 0.0
    %1051 = vmatprep.subr.mxu0 0.0
    %1052 = vmatpush1.msra.mxu0 0.0
    %1053 = vmatprep.subr.mxu0 0.0
    %1054 = vmatpush1.msra.mxu0 0.0
    %1055 = vmatprep.subr.mxu0 0.0
    %1056 = vmatpush1.msra.mxu0 0.0
    %1057 = vmatprep.subr.mxu0 0.0
    %1058 = vmatpush1.msra.mxu0 0.0
    %1059 = vmatprep.subr.mxu0 0.0
    %1060 = vmatpush1.msra.mxu0 0.0
    %1061 = vmatprep.subr.mxu0 0.0
    %1062 = vmatpush1.msra.mxu0 0.0
    %1063 = vmatprep.subr.mxu0 0.0
    %1064 = vmatpush1.msra.mxu0 0.0
    %1065 = vmatprep.subr.mxu0 0.0
    %1066 = vmatpush1.msra.mxu0 0.0
    %1067 = vmatprep.subr.mxu0 0.0
    %1068 = vmatpush1.msra.mxu0 0.0
    %1069 = vmatprep.subr.mxu0 0.0
    %1070 = vmatpush1.msra.mxu0 0.0
    %1071 = vmatprep.subr.mxu0 0.0
    %1072 = vmatpush1.msra.mxu0 0.0
    %1073 = vmatprep.subr.mxu0 0.0
    %1074 = vmatpush1.msra.mxu0 0.0
    %1075 = vmatprep.subr.mxu0 0.0
    %1076 = vmatpush1.msra.mxu0 0.0
    %1077 = vmatprep.subr.mxu0 0.0
    %1078 = vmatpush1.msra.mxu0 0.0
    %1079 = vmatprep.subr.mxu0 0.0
    %1080 = vmatpush1.msra.mxu0 0.0
    %1081 = vmatprep.subr.mxu0 0.0
    %1082 = vmatpush1.msra.mxu0 0.0
    %1083 = vmatprep.subr.mxu0 0.0
    %1084 = vmatpush1.msra.mxu0 0.0
    %1085 = vmatprep.mubr.f32.mxu0 0.0
    %1086 = vmatmul.mubr.f32.gmra.mrb[0].mxu0 %v1019
    %v1087 = vpop.f32.mrb[0].mxu0
    %v1088 = vadd.f32 %v1013, %v1087
    %v1089 = vpop.f32.mrb[0].mxu0
    %1090 = vdwg.mxu0
    %v1091 = vmax.f32 %v1088, 0.0
    %1092 = vrot.lane.b32.xlu0 %v1013, 96
    %v1093 = vpop.permute.xlu0 %1092
    %v1096 = vsel %vm1018, %v1091, 0
    %1098 = vmatprep.subr.mxu0 0.0
    %1099 = vmatpush1.msra.mxu0 %v995
    %1100 = vmatprep.subr.mxu0 0.0
    %1101 = vmatpush1.msra.mxu0 %v996
    %1102 = vmatprep.subr.mxu0 0.0
    %1103 = vmatpush1.msra.mxu0 %v997
    %1104 = vmatprep.subr.mxu0 0.0
    %1105 = vmatpush1.msra.mxu0 %v998
    %1106 = vmatprep.subr.mxu0 0.0
    %1107 = vmatpush1.msra.mxu0 0.0
    %1108 = vmatprep.subr.mxu0 0.0
    %1109 = vmatpush1.msra.mxu0 0.0
    %1110 = vmatprep.subr.mxu0 0.0
    %1111 = vmatpush1.msra.mxu0 0.0
    %1112 = vmatprep.subr.mxu0 0.0
    %1113 = vmatpush1.msra.mxu0 0.0
    %1114 = vmatprep.subr.mxu0 0.0
    %1115 = vmatpush1.msra.mxu0 0.0
    %1116 = vmatprep.subr.mxu0 0.0
    %1117 = vmatpush1.msra.mxu0 0.0
    %1118 = vmatprep.subr.mxu0 0.0
    %1119 = vmatpush1.msra.mxu0 0.0
    %1120 = vmatprep.subr.mxu0 0.0
    %1121 = vmatpush1.msra.mxu0 0.0
    %1122 = vmatprep.subr.mxu0 0.0
    %1123 = vmatpush1.msra.mxu0 0.0
    %1124 = vmatprep.subr.mxu0 0.0
    %1125 = vmatpush1.msra.mxu0 0.0
    %1126 = vmatprep.subr.mxu0 0.0
    %1127 = vmatpush1.msra.mxu0 0.0
    %1128 = vmatprep.subr.mxu0 0.0
    %1129 = vmatpush1.msra.mxu0 0.0
    %1130 = vmatprep.subr.mxu0 0.0
    %1131 = vmatpush1.msra.mxu0 0.0
    %1132 = vmatprep.subr.mxu0 0.0
    %1133 = vmatpush1.msra.mxu0 0.0
    %1134 = vmatprep.subr.mxu0 0.0
    %1135 = vmatpush1.msra.mxu0 0.0
    %1136 = vmatprep.subr.mxu0 0.0
    %1137 = vmatpush1.msra.mxu0 0.0
    %1138 = vmatprep.subr.mxu0 0.0
    %1139 = vmatpush1.msra.mxu0 0.0
    %1140 = vmatprep.subr.mxu0 0.0
    %1141 = vmatpush1.msra.mxu0 0.0
    %1142 = vmatprep.subr.mxu0 0.0
    %1143 = vmatpush1.msra.mxu0 0.0
    %1144 = vmatprep.subr.mxu0 0.0
    %1145 = vmatpush1.msra.mxu0 0.0
    %1146 = vmatprep.subr.mxu0 0.0
    %1147 = vmatpush1.msra.mxu0 0.0
    %1148 = vmatprep.subr.mxu0 0.0
    %1149 = vmatpush1.msra.mxu0 0.0
    %1150 = vmatprep.subr.mxu0 0.0
    %1151 = vmatpush1.msra.mxu0 0.0
    %1152 = vmatprep.subr.mxu0 0.0
    %1153 = vmatpush1.msra.mxu0 0.0
    %1154 = vmatprep.subr.mxu0 0.0
    %1155 = vmatpush1.msra.mxu0 0.0
    %1156 = vmatprep.subr.mxu0 0.0
    %1157 = vmatpush1.msra.mxu0 0.0
    %1158 = vmatprep.subr.mxu0 0.0
    %1159 = vmatpush1.msra.mxu0 0.0
    %1160 = vmatprep.subr.mxu0 0.0
    %1161 = vmatpush1.msra.mxu0 0.0
    %1162 = vmatprep.mubr.f32.mxu0 0.0
    %1163 = vmatmul.mubr.f32.gmra.mrb[0].mxu0 %v1096
    %v1164 = vpop.f32.mrb[0].mxu0
    %v1165 = vadd.f32 %v1093, %v1164
    %v1166 = vpop.f32.mrb[0].mxu0
    %1167 = vdwg.mxu0
    %v1168 = vmax.f32 %v1165, 0.0
    %1169 = vrot.lane.b32.xlu0 %v1013, 64
    %v1170 = vpop.permute.xlu0 %1169
    %v1173 = vsel %vm1018, %v1168, 0
    %1175 = vmatprep.subr.mxu0 0.0
    %1176 = vmatpush1.msra.mxu0 %v999
    %1177 = vmatprep.subr.mxu0 0.0
    %1178 = vmatpush1.msra.mxu0 %v1000
    %1179 = vmatprep.subr.mxu0 0.0
    %1180 = vmatpush1.msra.mxu0 %v1001
    %1181 = vmatprep.subr.mxu0 0.0
    %1182 = vmatpush1.msra.mxu0 %v1002
    %1183 = vmatprep.subr.mxu0 0.0
    %1184 = vmatpush1.msra.mxu0 0.0
    %1185 = vmatprep.subr.mxu0 0.0
    %1186 = vmatpush1.msra.mxu0 0.0
    %1187 = vmatprep.subr.mxu0 0.0
    %1188 = vmatpush1.msra.mxu0 0.0
    %1189 = vmatprep.subr.mxu0 0.0
    %1190 = vmatpush1.msra.mxu0 0.0
    %1191 = vmatprep.subr.mxu0 0.0
    %1192 = vmatpush1.msra.mxu0 0.0
    %1193 = vmatprep.subr.mxu0 0.0
    %1194 = vmatpush1.msra.mxu0 0.0
    %1195 = vmatprep.subr.mxu0 0.0
    %1196 = vmatpush1.msra.mxu0 0.0
    %1197 = vmatprep.subr.mxu0 0.0
    %1198 = vmatpush1.msra.mxu0 0.0
    %1199 = vmatprep.subr.mxu0 0.0
    %1200 = vmatpush1.msra.mxu0 0.0
    %1201 = vmatprep.subr.mxu0 0.0
    %1202 = vmatpush1.msra.mxu0 0.0
    %1203 = vmatprep.subr.mxu0 0.0
    %1204 = vmatpush1.msra.mxu0 0.0
    %1205 = vmatprep.subr.mxu0 0.0
    %1206 = vmatpush1.msra.mxu0 0.0
    %1207 = vmatprep.subr.mxu0 0.0
    %1208 = vmatpush1.msra.mxu0 0.0
    %1209 = vmatprep.subr.mxu0 0.0
    %1210 = vmatpush1.msra.mxu0 0.0
    %1211 = vmatprep.subr.mxu0 0.0
    %1212 = vmatpush1.msra.mxu0 0.0
    %1213 = vmatprep.subr.mxu0 0.0
    %1214 = vmatpush1.msra.mxu0 0.0
    %1215 = vmatprep.subr.mxu0 0.0
    %1216 = vmatpush1.msra.mxu0 0.0
    %1217 = vmatprep.subr.mxu0 0.0
    %1218 = vmatpush1.msra.mxu0 0.0
    %1219 = vmatprep.subr.mxu0 0.0
    %1220 = vmatpush1.msra.mxu0 0.0
    %1221 = vmatprep.subr.mxu0 0.0
    %1222 = vmatpush1.msra.mxu0 0.0
    %1223 = vmatprep.subr.mxu0 0.0
    %1224 = vmatpush1.msra.mxu0 0.0
    %1225 = vmatprep.subr.mxu0 0.0
    %1226 = vmatpush1.msra.mxu0 0.0
    %1227 = vmatprep.subr.mxu0 0.0
    %1228 = vmatpush1.msra.mxu0 0.0
    %1229 = vmatprep.subr.mxu0 0.0
    %1230 = vmatpush1.msra.mxu0 0.0
    %1231 = vmatprep.subr.mxu0 0.0
    %1232 = vmatpush1.msra.mxu0 0.0
    %1233 = vmatprep.subr.mxu0 0.0
    %1234 = vmatpush1.msra.mxu0 0.0
    %1235 = vmatprep.subr.mxu0 0.0
    %1236 = vmatpush1.msra.mxu0 0.0
    %1237 = vmatprep.subr.mxu0 0.0
    %1238 = vmatpush1.msra.mxu0 0.0
    %1239 = vmatprep.mubr.f32.mxu0 0.0
    %1240 = vmatmul.mubr.f32.gmra.mrb[0].mxu0 %v1173
    %v1241 = vpop.f32.mrb[0].mxu0
    %v1242 = vadd.f32 %v1170, %v1241
    %v1243 = vpop.f32.mrb[0].mxu0
    %1244 = vdwg.mxu0
    %v1245 = vmax.f32 %v1242, 0.0
    %1246 = vrot.lane.b32.xlu0 %v1013, 32
    %v1247 = vpop.permute.xlu0 %1246
    %v1250 = vsel %vm1018, %v1245, 0
    %1252 = vmatprep.subr.mxu0 0.0
    %1253 = vmatpush1.msra.mxu0 %v1003
    %1254 = vmatprep.subr.mxu0 0.0
    %1255 = vmatpush1.msra.mxu0 %v1004
    %1256 = vmatprep.subr.mxu0 0.0
    %1257 = vmatpush1.msra.mxu0 %v1005
    %1258 = vmatprep.subr.mxu0 0.0
    %1259 = vmatpush1.msra.mxu0 %v1006
    %1260 = vmatprep.subr.mxu0 0.0
    %1261 = vmatpush1.msra.mxu0 0.0
    %1262 = vmatprep.subr.mxu0 0.0
    %1263 = vmatpush1.msra.mxu0 0.0
    %1264 = vmatprep.subr.mxu0 0.0
    %1265 = vmatpush1.msra.mxu0 0.0
    %1266 = vmatprep.subr.mxu0 0.0
    %1267 = vmatpush1.msra.mxu0 0.0
    %1268 = vmatprep.subr.mxu0 0.0
    %1269 = vmatpush1.msra.mxu0 0.0
    %1270 = vmatprep.subr.mxu0 0.0
    %1271 = vmatpush1.msra.mxu0 0.0
    %1272 = vmatprep.subr.mxu0 0.0
    %1273 = vmatpush1.msra.mxu0 0.0
    %1274 = vmatprep.subr.mxu0 0.0
    %1275 = vmatpush1.msra.mxu0 0.0
    %1276 = vmatprep.subr.mxu0 0.0
    %1277 = vmatpush1.msra.mxu0 0.0
    %1278 = vmatprep.subr.mxu0 0.0
    %1279 = vmatpush1.msra.mxu0 0.0
    %1280 = vmatprep.subr.mxu0 0.0
    %1281 = vmatpush1.msra.mxu0 0.0
    %1282 = vmatprep.subr.mxu0 0.0
    %1283 = vmatpush1.msra.mxu0 0.0
    %1284 = vmatprep.subr.mxu0 0.0
    %1285 = vmatpush1.msra.mxu0 0.0
    %1286 = vmatprep.subr.mxu0 0.0
    %1287 = vmatpush1.msra.mxu0 0.0
    %1288 = vmatprep.subr.mxu0 0.0
    %1289 = vmatpush1.msra.mxu0 0.0
    %1290 = vmatprep.subr.mxu0 0.0
    %1291 = vmatpush1.msra.mxu0 0.0
    %1292 = vmatprep.subr.mxu0 0.0
    %1293 = vmatpush1.msra.mxu0 0.0
    %1294 = vmatprep.subr.mxu0 0.0
    %1295 = vmatpush1.msra.mxu0 0.0
    %1296 = vmatprep.subr.mxu0 0.0
    %1297 = vmatpush1.msra.mxu0 0.0
    %1298 = vmatprep.subr.mxu0 0.0
    %1299 = vmatpush1.msra.mxu0 0.0
    %1300 = vmatprep.subr.mxu0 0.0
    %1301 = vmatpush1.msra.mxu0 0.0
    %1302 = vmatprep.subr.mxu0 0.0
    %1303 = vmatpush1.msra.mxu0 0.0
    %1304 = vmatprep.subr.mxu0 0.0
    %1305 = vmatpush1.msra.mxu0 0.0
    %1306 = vmatprep.subr.mxu0 0.0
    %1307 = vmatpush1.msra.mxu0 0.0
    %1308 = vmatprep.subr.mxu0 0.0
    %1309 = vmatpush1.msra.mxu0 0.0
    %1310 = vmatprep.subr.mxu0 0.0
    %1311 = vmatpush1.msra.mxu0 0.0
    %1312 = vmatprep.subr.mxu0 0.0
    %1313 = vmatpush1.msra.mxu0 0.0
    %1314 = vmatprep.subr.mxu0 0.0
    %1315 = vmatpush1.msra.mxu0 0.0
    %1316 = vmatprep.mubr.f32.mxu0 0.0
    %1317 = vmatmul.mubr.f32.gmra.mrb[0].mxu0 %v1250
    %v1318 = vpop.f32.mrb[0].mxu0
    %v1319 = vadd.f32 %v1247, %v1318
    %v1320 = vpop.f32.mrb[0].mxu0
    %1321 = vdwg.mxu0
    %1324 = vrot.lane.b32.xlu0 %v1319, 32
    %v1325 = vpop.permute.xlu0 %1324
    %v1327 = vsel %vm1018, %v1017, %v1325
    %vm1328 = vcmask 517120
    %1329 = vst.msk [vmem:[%s2] sm:$0x3] %vm1328, %v1327
    // Predicated region
    $region14: #{model_handler_forward.1} parent=1 // pred_check
      _
    $region15: #{model_handler_forward.1} parent=1 // pred_check_branch
      %1331 = sbr.rel (0) target = $region17
    $region16: #{model_handler_forward.1} parent=1 // pred_region
      _
    $region17: #{model_handler_forward.1} parent=1 // pred_fallthru
      _
    // Predicated region
    $region18: #{model_handler_forward.1} parent=1 // pred_check
      _
    $region19: #{model_handler_forward.1} parent=1 // pred_check_branch
      %1333 = sbr.rel (0) target = $region21
    $region20: #{model_handler_forward.1} parent=1 // pred_region
      _
    $region21: #{model_handler_forward.1} parent=1 // pred_fallthru
      _
    %1334 = vsyncpa [#allocation3], 1

</llo_original>
